<compile_context>
chip_gen: v6e
topology: v6e:2x2x1
jax: 0.10.0
libtpu: 0.0.40
codegen_flags: <defaults>
</compile_context>

<pallas_src>
import functools
import math

import jax
import jax.numpy as jnp
from jax import lax
from jax.experimental import pallas as pl
from jax.experimental.pallas import tpu as pltpu


def _pick_unroll(seq_len):
    for cand in (8, 4, 2):
        if seq_len % cand == 0:
            return cand
    return 1


# ----------------------------------------------------------------------------
# Fused kernel: all RNN layers (wavefront) + last-timestep select + fc head
# ----------------------------------------------------------------------------
def make_fused_rnn_kernel(num_layers, seq_len, bb, hidden, d_in):
    """Kernel refs, in order:
         x          : (T, bb, D_in)   time-major batch chunk
         per layer l: w_ih_t (D_in_l, H), w_hh_t (H, H), b (1, H)   [b = b_ih + b_hh]
         w_fc_t     : (H, Cp)          (lane-padded classes)
         b_fc       : (1, Cp)
         out        : (bb, Cp)
       scratch:
         proj_ref   : (T*bb, H)        layer-0 input projection (VMEM)
    """
    n_w = 3 * num_layers
    unroll = _pick_unroll(seq_len)

    def kernel(x_ref, *args):
        w_fc_ref = args[n_w]
        b_fc_ref = args[n_w + 1]
        out_ref = args[n_w + 2]
        proj_ref = args[n_w + 3]

        # Layer-0 time-parallel input projection, hoisted out of the recurrence:
        # one (T*bb, D) @ (D, H) MXU matmul.  Parked in VMEM scratch so it does not
        # occupy vregs across the timestep loop (read back per step via pl.ds).
        x2d = x_ref[...].reshape(seq_len * bb, d_in)
        proj_ref[...] = (
            jnp.dot(x2d, args[0][...], preferred_element_type=jnp.float32)
            + args[2][...]
        )

        def step(t, hs):
            # Wavefront: layer l consumes layer l-1's hidden state of the SAME
            # timestep immediately -> dependent chain ~T + num_layers - 1 and no
            # (T*bb, H) per-layer activation buffer is ever materialized.
            start = pl.multiple_of(t * bb, 8)          # bb is a multiple of 8
            pre0 = proj_ref[pl.ds(start, bb), :] + jnp.dot(
                hs[0], args[1][...], preferred_element_type=jnp.float32)
            h_new = [jnp.tanh(pre0)]
            for l in range(1, num_layers):
                # Two independent MXU dots (they pipeline).  With H a multiple of
                # 128, pre-fuse [W_ih; W_hh] and feed concat([h_below, h_prev]) as
                # a single K=2H matmul instead.
                w_ih = args[3 * l][...]
                w_hh = args[3 * l + 1][...]
                b_l = args[3 * l + 2][...]
                pre_l = (
                    jnp.dot(h_new[l - 1], w_ih, preferred_element_type=jnp.float32)
                    + jnp.dot(hs[l], w_hh, preferred_element_type=jnp.float32)
                    + b_l
                )
                h_new.append(jnp.tanh(pre_l))
            return tuple(h_new)

        h_init = tuple(
            jnp.zeros((bb, hidden), jnp.float32) for _ in range(num_layers)
        )  # h0 = zeros, matches the module
        hs = lax.fori_loop(0, seq_len, step, h_init, unroll=unroll)

        # out[:, -1, :] -> Dropout(p=0) is identity -> fc head, all fused.
        # Cp is lane-padded to 128 so this is an unmasked full-tile store.
        out_ref[...] = (
            jnp.dot(hs[num_layers - 1], w_fc_ref[...],
                    preferred_element_type=jnp.float32)
            + b_fc_ref[...]
        )

    return kernel


# ----------------------------------------------------------------------------
# Wrapper
# ----------------------------------------------------------------------------
@functools.partial(jax.jit, static_argnames=("num_layers",))
def rnn_forward(x_btd, params, num_layers):
    """Matches RNN.forward: h0 = zeros, out = rnn(x)[:, -1, :], dropout(p=0), fc."""
    B, T, D = x_btd.shape
    H = params["layers"][0][1].shape[0]
    C = params["w_fc_t"].shape[1]

    # Pad batch to a multiple of 8 sublanes (f32); padded rows are independent
    # garbage and sliced off after the kernel.
    Bp = ((B + 7) // 8) * 8
    if Bp != B:
        x_btd = jnp.pad(x_btd, ((0, Bp - B), (0, 0), (0, 0)))

    # Batch-chunk grid: 2 chunks when it keeps 8-row alignment (uses both v7x
    # TensorCores via "parallel"; on v5e/v6e it's just a 2-step loop).
    num_chunks = 2 if (Bp % 16 == 0) else 1
    bb = Bp // num_chunks

    # Time-major layout so per-timestep slices of the hoisted projection are
    # contiguous, sublane-aligned (bb multiple of 8) rows.
    x_tm = jnp.transpose(x_btd, (1, 0, 2))            # (T, Bp, D)

    # Lane-dense output: pad classes to a multiple of 128 (unmasked stores).
    Cp = ((C + 127) // 128) * 128
    w_fc_p = jnp.pad(params["w_fc_t"], ((0, 0), (0, Cp - C)))
    b_fc_p = jnp.pad(params["b_fc"], ((0, 0), (0, Cp - C)))

    weight_inputs = []
    for l in range(num_layers):
        weight_inputs.extend(params["layers"][l])     # w_ih_t, w_hh_t, b
    weight_inputs += [w_fc_p, b_fc_p]

    def full_spec(a):
        nd = a.ndim
        return pl.BlockSpec(a.shape, lambda i, _nd=nd: (0,) * _nd)

    in_specs = [pl.BlockSpec((T, bb, D), lambda i: (0, i, 0))]
    in_specs += [full_spec(a) for a in weight_inputs]
    out_spec = pl.BlockSpec((bb, Cp), lambda i: (i, 0))

    # VMEM budget for the resident set (x chunk + weights + out + proj scratch),
    # with headroom for Pallas double-buffering.
    weight_elems = sum(int(math.prod(a.shape)) for a in weight_inputs)
    resident_bytes = 4 * (T * bb * D + weight_elems + bb * Cp + T * bb * H)
    vmem_limit = int(min(64 << 20, max(4 * resident_bytes + (2 << 20), 16 << 20)))

    flops = (
        2 * T * Bp * D * H                    # layer-0 input projection
        + 2 * T * Bp * H * H                  # layer-0 recurrence
        + (num_layers - 1) * 4 * T * Bp * H * H   # wavefront layers (2 dots each)
        + 2 * Bp * H * Cp                     # fc head
    )
    transcendentals = num_layers * T * Bp * H
    bytes_accessed = 4 * (T * Bp * D + weight_elems + Bp * Cp)

    kernel = make_fused_rnn_kernel(num_layers, T, bb, H, D)

    out = pl.pallas_call(
        kernel,
        grid=(num_chunks,),
        out_shape=jax.ShapeDtypeStruct((Bp, Cp), jnp.float32),
        in_specs=in_specs,
        out_specs=out_spec,
        scratch_shapes=[pltpu.VMEM((T * bb, H), jnp.float32)],
        compiler_params=pltpu.CompilerParams(
            dimension_semantics=("parallel",),
            vmem_limit_bytes=vmem_limit,
        ),
        cost_estimate=pl.CostEstimate(
            flops=flops,
            transcendentals=transcendentals,
            bytes_accessed=bytes_accessed,
        ),
    )(x_tm, *weight_inputs)

    return out[:B, :C]


# ----------------------------------------------------------------------------
# Deterministic parameter init (PyTorch-style uniform(-1/sqrt(H), 1/sqrt(H)))
# ----------------------------------------------------------------------------
def init_params(key, input_size, hidden_size, num_layers, num_classes):
    k_rnn = 1.0 / math.sqrt(hidden_size)
    layers = []
    for l in range(num_layers):
        d_in = input_size if l == 0 else hidden_size
        key, k1, k2, k3, k4 = jax.random.split(key, 5)
        w_ih = jax.random.uniform(k1, (hidden_size, d_in), jnp.float32, -k_rnn, k_rnn)
        w_hh = jax.random.uniform(k2, (hidden_size, hidden_size), jnp.float32, -k_rnn, k_rnn)
        b_ih = jax.random.uniform(k3, (hidden_size,), jnp.float32, -k_rnn, k_rnn)
        b_hh = jax.random.uniform(k4, (hidden_size,), jnp.float32, -k_rnn, k_rnn)
        # pre-transpose weights and fuse biases (kernel computes x @ W + h @ U + b)
        layers.append((w_ih.T, w_hh.T, (b_ih + b_hh)[None, :]))
    k_fc = 1.0 / math.sqrt(hidden_size)
    key, k5, k6 = jax.random.split(key, 3)
    w_fc = jax.random.uniform(k5, (num_classes, hidden_size), jnp.float32, -k_fc, k_fc)
    b_fc = jax.random.uniform(k6, (num_classes,), jnp.float32, -k_fc, k_fc)
    return {"layers": tuple(layers), "w_fc_t": w_fc.T, "b_fc": b_fc[None, :]}


# ----------------------------------------------------------------------------
# Pure-JAX reference (same math as torch.nn.RNN + Linear) for validation
# ----------------------------------------------------------------------------
def reference_forward(x_btd, params, num_layers):
    h_seq = jnp.transpose(x_btd, (1, 0, 2))  # (T, B, D)
    for l in range(num_layers):
        w_ih_t, w_hh_t, b = params["layers"][l]
        B = h_seq.shape[1]
        H = w_hh_t.shape[0]

        def step(h_prev, x_t):
            h_new = jnp.tanh(x_t @ w_ih_t + h_prev @ w_hh_t + b)
            return h_new, h_new

        h0 = jnp.zeros((B, H), jnp.float32)
        _, outs = jax.lax.scan(step, h0, h_seq)
        h_seq = outs
    last = h_seq[-1]
    return last @ params["w_fc_t"] + params["b_fc"]


# ----------------------------------------------------------------------------
if __name__ == "__main__":
    # Small shapes consistent with the module's forward: x is (batch, seq, input_size)
    batch, seq_len = 4, 8
    input_size, hidden_size, num_layers, num_classes = 16, 32, 2, 10

    key = jax.random.PRNGKey(0)
    key, kx, kp = jax.random.split(key, 3)
    x = jax.random.normal(kx, (batch, seq_len, input_size), jnp.float32)
    params = init_params(kp, input_size, hidden_size, num_layers, num_classes)

    out = rnn_forward(x, params, num_layers)
    out = jax.block_until_ready(out)

    ref = reference_forward(x, params, num_layers)
    assert out.shape == (batch, num_classes)
    assert jnp.allclose(out, ref, atol=1e-5, rtol=1e-5), "mismatch vs. reference"

    print("KERNEL_OK")
</pallas_src>

<mosaic_0001>
module attributes {stable_mosaic.version = 11 : i64} {
  func.func @kernel(%arg0: i32, %arg1: memref<8x8x16xf32, #tpu.memory_space<vmem>>, %arg2: memref<16x32xf32, #tpu.memory_space<vmem>>, %arg3: memref<32x32xf32, #tpu.memory_space<vmem>>, %arg4: memref<1x32xf32, #tpu.memory_space<vmem>>, %arg5: memref<32x32xf32, #tpu.memory_space<vmem>>, %arg6: memref<32x32xf32, #tpu.memory_space<vmem>>, %arg7: memref<1x32xf32, #tpu.memory_space<vmem>>, %arg8: memref<32x128xf32, #tpu.memory_space<vmem>>, %arg9: memref<1x128xf32, #tpu.memory_space<vmem>>, %arg10: memref<8x128xf32, #tpu.memory_space<vmem>>, %arg11: memref<64x32xf32, #tpu.memory_space<vmem>>) attributes {dimension_semantics = [#tpu.dimension_semantics<parallel>], iteration_bounds = array<i64: 1>, scalar_prefetch = 0 : i64, scratch_operands = 1 : i64, tpu.core_type = #tpu.core_type<tc>, window_params = [{transform_indices = @transform_0, window_bounds = array<i64: 8, 8, 16>}, {pipeline_mode = #tpu.pipeline_mode<synchronous>, transform_indices = @transform_1, window_bounds = array<i64: 16, 32>}, {pipeline_mode = #tpu.pipeline_mode<synchronous>, transform_indices = @transform_2, window_bounds = array<i64: 32, 32>}, {pipeline_mode = #tpu.pipeline_mode<synchronous>, transform_indices = @transform_3, window_bounds = array<i64: 1, 32>}, {pipeline_mode = #tpu.pipeline_mode<synchronous>, transform_indices = @transform_4, window_bounds = array<i64: 32, 32>}, {pipeline_mode = #tpu.pipeline_mode<synchronous>, transform_indices = @transform_5, window_bounds = array<i64: 32, 32>}, {pipeline_mode = #tpu.pipeline_mode<synchronous>, transform_indices = @transform_6, window_bounds = array<i64: 1, 32>}, {pipeline_mode = #tpu.pipeline_mode<synchronous>, transform_indices = @transform_7, window_bounds = array<i64: 32, 128>}, {pipeline_mode = #tpu.pipeline_mode<synchronous>, transform_indices = @transform_8, window_bounds = array<i64: 1, 128>}, {transform_indices = @transform_9, window_bounds = array<i64: 8, 128>}]} {
    %c0 = arith.constant 0 : index
    %c0_0 = arith.constant 0 : index
    %c0_1 = arith.constant 0 : index
    %0 = vector.load %arg1[%c0, %c0_0, %c0_1] : memref<8x8x16xf32, #tpu.memory_space<vmem>>, vector<8x8x16xf32>
    %1 = vector.shape_cast %0 : vector<8x8x16xf32> to vector<64x16xf32>
    %c0_2 = arith.constant 0 : index
    %c0_3 = arith.constant 0 : index
    %2 = vector.load %arg2[%c0_2, %c0_3] : memref<16x32xf32, #tpu.memory_space<vmem>>, vector<16x32xf32>
    %cst = arith.constant dense<0.000000e+00> : vector<64x32xf32>
    %3 = tpu.matmul %1, %2, %cst {dimension_numbers = #tpu.dot_dimension_numbers<[1], [0], [0], [1], [0, 0, 1, 1], [], []>} : vector<64x16xf32>, vector<16x32xf32>, vector<64x32xf32> -> vector<64x32xf32>
    %c0_4 = arith.constant 0 : index
    %c0_5 = arith.constant 0 : index
    %4 = vector.load %arg4[%c0_4, %c0_5] : memref<1x32xf32, #tpu.memory_space<vmem>>, vector<1x32xf32>
    %5 = vector.broadcast %4 : vector<1x32xf32> to vector<64x32xf32>
    %6 = arith.addf %3, %5 : vector<64x32xf32>
    %c0_6 = arith.constant 0 : index
    %c0_7 = arith.constant 0 : index
    %7 = vector.load %arg11[%c0_6, %c0_7] : memref<64x32xf32, #tpu.memory_space<vmem>>, vector<64x32xf32>
    tpu.vector_store %arg11[%c0_6, %c0_7], %6 {strides = array<i32>} : memref<64x32xf32, #tpu.memory_space<vmem>>, vector<64x32xf32>,
    %cst_8 = arith.constant 0.000000e+00 : f32
    %8 = vector.broadcast %cst_8 : f32 to vector<8x32xf32>
    %cst_9 = arith.constant 0.000000e+00 : f32
    %9 = vector.broadcast %cst_9 : f32 to vector<8x32xf32>
    %c0_i32 = arith.constant 0 : i32
    %c8_i32 = arith.constant 8 : i32
    %10 = arith.muli %c0_i32, %c8_i32 : i32
    %11 = tpu.assume_multiple %10, 8 : i32
    %12 = arith.index_cast %11 : i32 to index
    %c0_10 = arith.constant 0 : index
    %13 = vector.load %arg11[%12, %c0_10] : memref<64x32xf32, #tpu.memory_space<vmem>>, vector<8x32xf32>
    %c0_11 = arith.constant 0 : index
    %c0_12 = arith.constant 0 : index
    %14 = vector.load %arg3[%c0_11, %c0_12] : memref<32x32xf32, #tpu.memory_space<vmem>>, vector<32x32xf32>
    %cst_13 = arith.constant dense<0.000000e+00> : vector<8x32xf32>
    %15 = tpu.matmul %8, %14, %cst_13 {dimension_numbers = #tpu.dot_dimension_numbers<[1], [0], [0], [1], [0, 0, 1, 1], [], []>} : vector<8x32xf32>, vector<32x32xf32>, vector<8x32xf32> -> vector<8x32xf32>
    %16 = arith.addf %13, %15 : vector<8x32xf32>
    %17 = math.tanh %16 : vector<8x32xf32>
    %c0_14 = arith.constant 0 : index
    %c0_15 = arith.constant 0 : index
    %18 = vector.load %arg5[%c0_14, %c0_15] : memref<32x32xf32, #tpu.memory_space<vmem>>, vector<32x32xf32>
    %c0_16 = arith.constant 0 : index
    %c0_17 = arith.constant 0 : index
    %19 = vector.load %arg6[%c0_16, %c0_17] : memref<32x32xf32, #tpu.memory_space<vmem>>, vector<32x32xf32>
    %c0_18 = arith.constant 0 : index
    %c0_19 = arith.constant 0 : index
    %20 = vector.load %arg7[%c0_18, %c0_19] : memref<1x32xf32, #tpu.memory_space<vmem>>, vector<1x32xf32>
    %cst_20 = arith.constant dense<0.000000e+00> : vector<8x32xf32>
    %21 = tpu.matmul %17, %18, %cst_20 {dimension_numbers = #tpu.dot_dimension_numbers<[1], [0], [0], [1], [0, 0, 1, 1], [], []>} : vector<8x32xf32>, vector<32x32xf32>, vector<8x32xf32> -> vector<8x32xf32>
    %cst_21 = arith.constant dense<0.000000e+00> : vector<8x32xf32>
    %22 = tpu.matmul %9, %19, %cst_21 {dimension_numbers = #tpu.dot_dimension_numbers<[1], [0], [0], [1], [0, 0, 1, 1], [], []>} : vector<8x32xf32>, vector<32x32xf32>, vector<8x32xf32> -> vector<8x32xf32>
    %23 = arith.addf %21, %22 : vector<8x32xf32>
    %24 = vector.broadcast %20 : vector<1x32xf32> to vector<8x32xf32>
    %25 = arith.addf %23, %24 : vector<8x32xf32>
    %26 = math.tanh %25 : vector<8x32xf32>
    %c1_i32 = arith.constant 1 : i32
    %c8_i32_22 = arith.constant 8 : i32
    %27 = arith.muli %c1_i32, %c8_i32_22 : i32
    %28 = tpu.assume_multiple %27, 8 : i32
    %29 = arith.index_cast %28 : i32 to index
    %c0_23 = arith.constant 0 : index
    %30 = vector.load %arg11[%29, %c0_23] : memref<64x32xf32, #tpu.memory_space<vmem>>, vector<8x32xf32>
    %c0_24 = arith.constant 0 : index
    %c0_25 = arith.constant 0 : index
    %31 = vector.load %arg3[%c0_24, %c0_25] : memref<32x32xf32, #tpu.memory_space<vmem>>, vector<32x32xf32>
    %cst_26 = arith.constant dense<0.000000e+00> : vector<8x32xf32>
    %32 = tpu.matmul %17, %31, %cst_26 {dimension_numbers = #tpu.dot_dimension_numbers<[1], [0], [0], [1], [0, 0, 1, 1], [], []>} : vector<8x32xf32>, vector<32x32xf32>, vector<8x32xf32> -> vector<8x32xf32>
    %33 = arith.addf %30, %32 : vector<8x32xf32>
    %34 = math.tanh %33 : vector<8x32xf32>
    %c0_27 = arith.constant 0 : index
    %c0_28 = arith.constant 0 : index
    %35 = vector.load %arg5[%c0_27, %c0_28] : memref<32x32xf32, #tpu.memory_space<vmem>>, vector<32x32xf32>
    %c0_29 = arith.constant 0 : index
    %c0_30 = arith.constant 0 : index
    %36 = vector.load %arg6[%c0_29, %c0_30] : memref<32x32xf32, #tpu.memory_space<vmem>>, vector<32x32xf32>
    %c0_31 = arith.constant 0 : index
    %c0_32 = arith.constant 0 : index
    %37 = vector.load %arg7[%c0_31, %c0_32] : memref<1x32xf32, #tpu.memory_space<vmem>>, vector<1x32xf32>
    %cst_33 = arith.constant dense<0.000000e+00> : vector<8x32xf32>
    %38 = tpu.matmul %34, %35, %cst_33 {dimension_numbers = #tpu.dot_dimension_numbers<[1], [0], [0], [1], [0, 0, 1, 1], [], []>} : vector<8x32xf32>, vector<32x32xf32>, vector<8x32xf32> -> vector<8x32xf32>
    %cst_34 = arith.constant dense<0.000000e+00> : vector<8x32xf32>
    %39 = tpu.matmul %26, %36, %cst_34 {dimension_numbers = #tpu.dot_dimension_numbers<[1], [0], [0], [1], [0, 0, 1, 1], [], []>} : vector<8x32xf32>, vector<32x32xf32>, vector<8x32xf32> -> vector<8x32xf32>
    %40 = arith.addf %38, %39 : vector<8x32xf32>
    %41 = vector.broadcast %37 : vector<1x32xf32> to vector<8x32xf32>
    %42 = arith.addf %40, %41 : vector<8x32xf32>
    %43 = math.tanh %42 : vector<8x32xf32>
    %c2_i32 = arith.constant 2 : i32
    %c8_i32_35 = arith.constant 8 : i32
    %44 = arith.muli %c2_i32, %c8_i32_35 : i32
    %45 = tpu.assume_multiple %44, 8 : i32
    %46 = arith.index_cast %45 : i32 to index
    %c0_36 = arith.constant 0 : index
    %47 = vector.load %arg11[%46, %c0_36] : memref<64x32xf32, #tpu.memory_space<vmem>>, vector<8x32xf32>
    %c0_37 = arith.constant 0 : index
    %c0_38 = arith.constant 0 : index
    %48 = vector.load %arg3[%c0_37, %c0_38] : memref<32x32xf32, #tpu.memory_space<vmem>>, vector<32x32xf32>
    %cst_39 = arith.constant dense<0.000000e+00> : vector<8x32xf32>
    %49 = tpu.matmul %34, %48, %cst_39 {dimension_numbers = #tpu.dot_dimension_numbers<[1], [0], [0], [1], [0, 0, 1, 1], [], []>} : vector<8x32xf32>, vector<32x32xf32>, vector<8x32xf32> -> vector<8x32xf32>
    %50 = arith.addf %47, %49 : vector<8x32xf32>
    %51 = math.tanh %50 : vector<8x32xf32>
    %c0_40 = arith.constant 0 : index
    %c0_41 = arith.constant 0 : index
    %52 = vector.load %arg5[%c0_40, %c0_41] : memref<32x32xf32, #tpu.memory_space<vmem>>, vector<32x32xf32>
    %c0_42 = arith.constant 0 : index
    %c0_43 = arith.constant 0 : index
    %53 = vector.load %arg6[%c0_42, %c0_43] : memref<32x32xf32, #tpu.memory_space<vmem>>, vector<32x32xf32>
    %c0_44 = arith.constant 0 : index
    %c0_45 = arith.constant 0 : index
    %54 = vector.load %arg7[%c0_44, %c0_45] : memref<1x32xf32, #tpu.memory_space<vmem>>, vector<1x32xf32>
    %cst_46 = arith.constant dense<0.000000e+00> : vector<8x32xf32>
    %55 = tpu.matmul %51, %52, %cst_46 {dimension_numbers = #tpu.dot_dimension_numbers<[1], [0], [0], [1], [0, 0, 1, 1], [], []>} : vector<8x32xf32>, vector<32x32xf32>, vector<8x32xf32> -> vector<8x32xf32>
    %cst_47 = arith.constant dense<0.000000e+00> : vector<8x32xf32>
    %56 = tpu.matmul %43, %53, %cst_47 {dimension_numbers = #tpu.dot_dimension_numbers<[1], [0], [0], [1], [0, 0, 1, 1], [], []>} : vector<8x32xf32>, vector<32x32xf32>, vector<8x32xf32> -> vector<8x32xf32>
    %57 = arith.addf %55, %56 : vector<8x32xf32>
    %58 = vector.broadcast %54 : vector<1x32xf32> to vector<8x32xf32>
    %59 = arith.addf %57, %58 : vector<8x32xf32>
    %60 = math.tanh %59 : vector<8x32xf32>
    %c3_i32 = arith.constant 3 : i32
    %c8_i32_48 = arith.constant 8 : i32
    %61 = arith.muli %c3_i32, %c8_i32_48 : i32
    %62 = tpu.assume_multiple %61, 8 : i32
    %63 = arith.index_cast %62 : i32 to index
    %c0_49 = arith.constant 0 : index
    %64 = vector.load %arg11[%63, %c0_49] : memref<64x32xf32, #tpu.memory_space<vmem>>, vector<8x32xf32>
    %c0_50 = arith.constant 0 : index
    %c0_51 = arith.constant 0 : index
    %65 = vector.load %arg3[%c0_50, %c0_51] : memref<32x32xf32, #tpu.memory_space<vmem>>, vector<32x32xf32>
    %cst_52 = arith.constant dense<0.000000e+00> : vector<8x32xf32>
    %66 = tpu.matmul %51, %65, %cst_52 {dimension_numbers = #tpu.dot_dimension_numbers<[1], [0], [0], [1], [0, 0, 1, 1], [], []>} : vector<8x32xf32>, vector<32x32xf32>, vector<8x32xf32> -> vector<8x32xf32>
    %67 = arith.addf %64, %66 : vector<8x32xf32>
    %68 = math.tanh %67 : vector<8x32xf32>
    %c0_53 = arith.constant 0 : index
    %c0_54 = arith.constant 0 : index
    %69 = vector.load %arg5[%c0_53, %c0_54] : memref<32x32xf32, #tpu.memory_space<vmem>>, vector<32x32xf32>
    %c0_55 = arith.constant 0 : index
    %c0_56 = arith.constant 0 : index
    %70 = vector.load %arg6[%c0_55, %c0_56] : memref<32x32xf32, #tpu.memory_space<vmem>>, vector<32x32xf32>
    %c0_57 = arith.constant 0 : index
    %c0_58 = arith.constant 0 : index
    %71 = vector.load %arg7[%c0_57, %c0_58] : memref<1x32xf32, #tpu.memory_space<vmem>>, vector<1x32xf32>
    %cst_59 = arith.constant dense<0.000000e+00> : vector<8x32xf32>
    %72 = tpu.matmul %68, %69, %cst_59 {dimension_numbers = #tpu.dot_dimension_numbers<[1], [0], [0], [1], [0, 0, 1, 1], [], []>} : vector<8x32xf32>, vector<32x32xf32>, vector<8x32xf32> -> vector<8x32xf32>
    %cst_60 = arith.constant dense<0.000000e+00> : vector<8x32xf32>
    %73 = tpu.matmul %60, %70, %cst_60 {dimension_numbers = #tpu.dot_dimension_numbers<[1], [0], [0], [1], [0, 0, 1, 1], [], []>} : vector<8x32xf32>, vector<32x32xf32>, vector<8x32xf32> -> vector<8x32xf32>
    %74 = arith.addf %72, %73 : vector<8x32xf32>
    %75 = vector.broadcast %71 : vector<1x32xf32> to vector<8x32xf32>
    %76 = arith.addf %74, %75 : vector<8x32xf32>
    %77 = math.tanh %76 : vector<8x32xf32>
    %c4_i32 = arith.constant 4 : i32
    %c8_i32_61 = arith.constant 8 : i32
    %78 = arith.muli %c4_i32, %c8_i32_61 : i32
    %79 = tpu.assume_multiple %78, 8 : i32
    %80 = arith.index_cast %79 : i32 to index
    %c0_62 = arith.constant 0 : index
    %81 = vector.load %arg11[%80, %c0_62] : memref<64x32xf32, #tpu.memory_space<vmem>>, vector<8x32xf32>
    %c0_63 = arith.constant 0 : index
    %c0_64 = arith.constant 0 : index
    %82 = vector.load %arg3[%c0_63, %c0_64] : memref<32x32xf32, #tpu.memory_space<vmem>>, vector<32x32xf32>
    %cst_65 = arith.constant dense<0.000000e+00> : vector<8x32xf32>
    %83 = tpu.matmul %68, %82, %cst_65 {dimension_numbers = #tpu.dot_dimension_numbers<[1], [0], [0], [1], [0, 0, 1, 1], [], []>} : vector<8x32xf32>, vector<32x32xf32>, vector<8x32xf32> -> vector<8x32xf32>
    %84 = arith.addf %81, %83 : vector<8x32xf32>
    %85 = math.tanh %84 : vector<8x32xf32>
    %c0_66 = arith.constant 0 : index
    %c0_67 = arith.constant 0 : index
    %86 = vector.load %arg5[%c0_66, %c0_67] : memref<32x32xf32, #tpu.memory_space<vmem>>, vector<32x32xf32>
    %c0_68 = arith.constant 0 : index
    %c0_69 = arith.constant 0 : index
    %87 = vector.load %arg6[%c0_68, %c0_69] : memref<32x32xf32, #tpu.memory_space<vmem>>, vector<32x32xf32>
    %c0_70 = arith.constant 0 : index
    %c0_71 = arith.constant 0 : index
    %88 = vector.load %arg7[%c0_70, %c0_71] : memref<1x32xf32, #tpu.memory_space<vmem>>, vector<1x32xf32>
    %cst_72 = arith.constant dense<0.000000e+00> : vector<8x32xf32>
    %89 = tpu.matmul %85, %86, %cst_72 {dimension_numbers = #tpu.dot_dimension_numbers<[1], [0], [0], [1], [0, 0, 1, 1], [], []>} : vector<8x32xf32>, vector<32x32xf32>, vector<8x32xf32> -> vector<8x32xf32>
    %cst_73 = arith.constant dense<0.000000e+00> : vector<8x32xf32>
    %90 = tpu.matmul %77, %87, %cst_73 {dimension_numbers = #tpu.dot_dimension_numbers<[1], [0], [0], [1], [0, 0, 1, 1], [], []>} : vector<8x32xf32>, vector<32x32xf32>, vector<8x32xf32> -> vector<8x32xf32>
    %91 = arith.addf %89, %90 : vector<8x32xf32>
    %92 = vector.broadcast %88 : vector<1x32xf32> to vector<8x32xf32>
    %93 = arith.addf %91, %92 : vector<8x32xf32>
    %94 = math.tanh %93 : vector<8x32xf32>
    %c5_i32 = arith.constant 5 : i32
    %c8_i32_74 = arith.constant 8 : i32
    %95 = arith.muli %c5_i32, %c8_i32_74 : i32
    %96 = tpu.assume_multiple %95, 8 : i32
    %97 = arith.index_cast %96 : i32 to index
    %c0_75 = arith.constant 0 : index
    %98 = vector.load %arg11[%97, %c0_75] : memref<64x32xf32, #tpu.memory_space<vmem>>, vector<8x32xf32>
    %c0_76 = arith.constant 0 : index
    %c0_77 = arith.constant 0 : index
    %99 = vector.load %arg3[%c0_76, %c0_77] : memref<32x32xf32, #tpu.memory_space<vmem>>, vector<32x32xf32>
    %cst_78 = arith.constant dense<0.000000e+00> : vector<8x32xf32>
    %100 = tpu.matmul %85, %99, %cst_78 {dimension_numbers = #tpu.dot_dimension_numbers<[1], [0], [0], [1], [0, 0, 1, 1], [], []>} : vector<8x32xf32>, vector<32x32xf32>, vector<8x32xf32> -> vector<8x32xf32>
    %101 = arith.addf %98, %100 : vector<8x32xf32>
    %102 = math.tanh %101 : vector<8x32xf32>
    %c0_79 = arith.constant 0 : index
    %c0_80 = arith.constant 0 : index
    %103 = vector.load %arg5[%c0_79, %c0_80] : memref<32x32xf32, #tpu.memory_space<vmem>>, vector<32x32xf32>
    %c0_81 = arith.constant 0 : index
    %c0_82 = arith.constant 0 : index
    %104 = vector.load %arg6[%c0_81, %c0_82] : memref<32x32xf32, #tpu.memory_space<vmem>>, vector<32x32xf32>
    %c0_83 = arith.constant 0 : index
    %c0_84 = arith.constant 0 : index
    %105 = vector.load %arg7[%c0_83, %c0_84] : memref<1x32xf32, #tpu.memory_space<vmem>>, vector<1x32xf32>
    %cst_85 = arith.constant dense<0.000000e+00> : vector<8x32xf32>
    %106 = tpu.matmul %102, %103, %cst_85 {dimension_numbers = #tpu.dot_dimension_numbers<[1], [0], [0], [1], [0, 0, 1, 1], [], []>} : vector<8x32xf32>, vector<32x32xf32>, vector<8x32xf32> -> vector<8x32xf32>
    %cst_86 = arith.constant dense<0.000000e+00> : vector<8x32xf32>
    %107 = tpu.matmul %94, %104, %cst_86 {dimension_numbers = #tpu.dot_dimension_numbers<[1], [0], [0], [1], [0, 0, 1, 1], [], []>} : vector<8x32xf32>, vector<32x32xf32>, vector<8x32xf32> -> vector<8x32xf32>
    %108 = arith.addf %106, %107 : vector<8x32xf32>
    %109 = vector.broadcast %105 : vector<1x32xf32> to vector<8x32xf32>
    %110 = arith.addf %108, %109 : vector<8x32xf32>
    %111 = math.tanh %110 : vector<8x32xf32>
    %c6_i32 = arith.constant 6 : i32
    %c8_i32_87 = arith.constant 8 : i32
    %112 = arith.muli %c6_i32, %c8_i32_87 : i32
    %113 = tpu.assume_multiple %112, 8 : i32
    %114 = arith.index_cast %113 : i32 to index
    %c0_88 = arith.constant 0 : index
    %115 = vector.load %arg11[%114, %c0_88] : memref<64x32xf32, #tpu.memory_space<vmem>>, vector<8x32xf32>
    %c0_89 = arith.constant 0 : index
    %c0_90 = arith.constant 0 : index
    %116 = vector.load %arg3[%c0_89, %c0_90] : memref<32x32xf32, #tpu.memory_space<vmem>>, vector<32x32xf32>
    %cst_91 = arith.constant dense<0.000000e+00> : vector<8x32xf32>
    %117 = tpu.matmul %102, %116, %cst_91 {dimension_numbers = #tpu.dot_dimension_numbers<[1], [0], [0], [1], [0, 0, 1, 1], [], []>} : vector<8x32xf32>, vector<32x32xf32>, vector<8x32xf32> -> vector<8x32xf32>
    %118 = arith.addf %115, %117 : vector<8x32xf32>
    %119 = math.tanh %118 : vector<8x32xf32>
    %c0_92 = arith.constant 0 : index
    %c0_93 = arith.constant 0 : index
    %120 = vector.load %arg5[%c0_92, %c0_93] : memref<32x32xf32, #tpu.memory_space<vmem>>, vector<32x32xf32>
    %c0_94 = arith.constant 0 : index
    %c0_95 = arith.constant 0 : index
    %121 = vector.load %arg6[%c0_94, %c0_95] : memref<32x32xf32, #tpu.memory_space<vmem>>, vector<32x32xf32>
    %c0_96 = arith.constant 0 : index
    %c0_97 = arith.constant 0 : index
    %122 = vector.load %arg7[%c0_96, %c0_97] : memref<1x32xf32, #tpu.memory_space<vmem>>, vector<1x32xf32>
    %cst_98 = arith.constant dense<0.000000e+00> : vector<8x32xf32>
    %123 = tpu.matmul %119, %120, %cst_98 {dimension_numbers = #tpu.dot_dimension_numbers<[1], [0], [0], [1], [0, 0, 1, 1], [], []>} : vector<8x32xf32>, vector<32x32xf32>, vector<8x32xf32> -> vector<8x32xf32>
    %cst_99 = arith.constant dense<0.000000e+00> : vector<8x32xf32>
    %124 = tpu.matmul %111, %121, %cst_99 {dimension_numbers = #tpu.dot_dimension_numbers<[1], [0], [0], [1], [0, 0, 1, 1], [], []>} : vector<8x32xf32>, vector<32x32xf32>, vector<8x32xf32> -> vector<8x32xf32>
    %125 = arith.addf %123, %124 : vector<8x32xf32>
    %126 = vector.broadcast %122 : vector<1x32xf32> to vector<8x32xf32>
    %127 = arith.addf %125, %126 : vector<8x32xf32>
    %128 = math.tanh %127 : vector<8x32xf32>
    %c7_i32 = arith.constant 7 : i32
    %c8_i32_100 = arith.constant 8 : i32
    %129 = arith.muli %c7_i32, %c8_i32_100 : i32
    %130 = tpu.assume_multiple %129, 8 : i32
    %131 = arith.index_cast %130 : i32 to index
    %c0_101 = arith.constant 0 : index
    %132 = vector.load %arg11[%131, %c0_101] : memref<64x32xf32, #tpu.memory_space<vmem>>, vector<8x32xf32>
    %c0_102 = arith.constant 0 : index
    %c0_103 = arith.constant 0 : index
    %133 = vector.load %arg3[%c0_102, %c0_103] : memref<32x32xf32, #tpu.memory_space<vmem>>, vector<32x32xf32>
    %cst_104 = arith.constant dense<0.000000e+00> : vector<8x32xf32>
    %134 = tpu.matmul %119, %133, %cst_104 {dimension_numbers = #tpu.dot_dimension_numbers<[1], [0], [0], [1], [0, 0, 1, 1], [], []>} : vector<8x32xf32>, vector<32x32xf32>, vector<8x32xf32> -> vector<8x32xf32>
    %135 = arith.addf %132, %134 : vector<8x32xf32>
    %136 = math.tanh %135 : vector<8x32xf32>
    %c0_105 = arith.constant 0 : index
    %c0_106 = arith.constant 0 : index
    %137 = vector.load %arg5[%c0_105, %c0_106] : memref<32x32xf32, #tpu.memory_space<vmem>>, vector<32x32xf32>
    %c0_107 = arith.constant 0 : index
    %c0_108 = arith.constant 0 : index
    %138 = vector.load %arg6[%c0_107, %c0_108] : memref<32x32xf32, #tpu.memory_space<vmem>>, vector<32x32xf32>
    %c0_109 = arith.constant 0 : index
    %c0_110 = arith.constant 0 : index
    %139 = vector.load %arg7[%c0_109, %c0_110] : memref<1x32xf32, #tpu.memory_space<vmem>>, vector<1x32xf32>
    %cst_111 = arith.constant dense<0.000000e+00> : vector<8x32xf32>
    %140 = tpu.matmul %136, %137, %cst_111 {dimension_numbers = #tpu.dot_dimension_numbers<[1], [0], [0], [1], [0, 0, 1, 1], [], []>} : vector<8x32xf32>, vector<32x32xf32>, vector<8x32xf32> -> vector<8x32xf32>
    %cst_112 = arith.constant dense<0.000000e+00> : vector<8x32xf32>
    %141 = tpu.matmul %128, %138, %cst_112 {dimension_numbers = #tpu.dot_dimension_numbers<[1], [0], [0], [1], [0, 0, 1, 1], [], []>} : vector<8x32xf32>, vector<32x32xf32>, vector<8x32xf32> -> vector<8x32xf32>
    %142 = arith.addf %140, %141 : vector<8x32xf32>
    %143 = vector.broadcast %139 : vector<1x32xf32> to vector<8x32xf32>
    %144 = arith.addf %142, %143 : vector<8x32xf32>
    %145 = math.tanh %144 : vector<8x32xf32>
    %c8_i32_113 = arith.constant 8 : i32
    %c0_114 = arith.constant 0 : index
    %c0_115 = arith.constant 0 : index
    %146 = vector.load %arg8[%c0_114, %c0_115] : memref<32x128xf32, #tpu.memory_space<vmem>>, vector<32x128xf32>
    %cst_116 = arith.constant dense<0.000000e+00> : vector<8x128xf32>
    %147 = tpu.matmul %145, %146, %cst_116 {dimension_numbers = #tpu.dot_dimension_numbers<[1], [0], [0], [1], [0, 0, 1, 1], [], []>} : vector<8x32xf32>, vector<32x128xf32>, vector<8x128xf32> -> vector<8x128xf32>
    %c0_117 = arith.constant 0 : index
    %c0_118 = arith.constant 0 : index
    %148 = vector.load %arg9[%c0_117, %c0_118] : memref<1x128xf32, #tpu.memory_space<vmem>>, vector<1x128xf32>
    %149 = vector.broadcast %148 : vector<1x128xf32> to vector<8x128xf32>
    %150 = arith.addf %147, %149 : vector<8x128xf32>
    %c0_119 = arith.constant 0 : index
    %c0_120 = arith.constant 0 : index
    %151 = vector.load %arg10[%c0_119, %c0_120] : memref<8x128xf32, #tpu.memory_space<vmem>>, vector<8x128xf32>
    tpu.vector_store %arg10[%c0_119, %c0_120], %150 {strides = array<i32>} : memref<8x128xf32, #tpu.memory_space<vmem>>, vector<8x128xf32>,
    return
  }
  func.func @transform_0(%arg0: i32) -> (i32, i32, i32) {
    %c0_i32 = arith.constant 0 : i32
    %c0_i32_0 = arith.constant 0 : i32
    %c0_i32_1 = arith.constant 0 : i32
    return %c0_i32, %arg0, %c0_i32_0 : i32, i32, i32
  }
  func.func @transform_1(%arg0: i32) -> (i32, i32) {
    %c0_i32 = arith.constant 0 : i32
    %c0_i32_0 = arith.constant 0 : i32
    %c0_i32_1 = arith.constant 0 : i32
    return %c0_i32, %c0_i32_0 : i32, i32
  }
  func.func @transform_2(%arg0: i32) -> (i32, i32) {
    %c0_i32 = arith.constant 0 : i32
    %c0_i32_0 = arith.constant 0 : i32
    %c0_i32_1 = arith.constant 0 : i32
    return %c0_i32, %c0_i32_0 : i32, i32
  }
  func.func @transform_3(%arg0: i32) -> (i32, i32) {
    %c0_i32 = arith.constant 0 : i32
    %c0_i32_0 = arith.constant 0 : i32
    %c0_i32_1 = arith.constant 0 : i32
    return %c0_i32, %c0_i32_0 : i32, i32
  }
  func.func @transform_4(%arg0: i32) -> (i32, i32) {
    %c0_i32 = arith.constant 0 : i32
    %c0_i32_0 = arith.constant 0 : i32
    %c0_i32_1 = arith.constant 0 : i32
    return %c0_i32, %c0_i32_0 : i32, i32
  }
  func.func @transform_5(%arg0: i32) -> (i32, i32) {
    %c0_i32 = arith.constant 0 : i32
    %c0_i32_0 = arith.constant 0 : i32
    %c0_i32_1 = arith.constant 0 : i32
    return %c0_i32, %c0_i32_0 : i32, i32
  }
  func.func @transform_6(%arg0: i32) -> (i32, i32) {
    %c0_i32 = arith.constant 0 : i32
    %c0_i32_0 = arith.constant 0 : i32
    %c0_i32_1 = arith.constant 0 : i32
    return %c0_i32, %c0_i32_0 : i32, i32
  }
  func.func @transform_7(%arg0: i32) -> (i32, i32) {
    %c0_i32 = arith.constant 0 : i32
    %c0_i32_0 = arith.constant 0 : i32
    %c0_i32_1 = arith.constant 0 : i32
    return %c0_i32, %c0_i32_0 : i32, i32
  }
  func.func @transform_8(%arg0: i32) -> (i32, i32) {
    %c0_i32 = arith.constant 0 : i32
    %c0_i32_0 = arith.constant 0 : i32
    %c0_i32_1 = arith.constant 0 : i32
    return %c0_i32, %c0_i32_0 : i32, i32
  }
  func.func @transform_9(%arg0: i32) -> (i32, i32) {
    %c0_i32 = arith.constant 0 : i32
    %c0_i32_0 = arith.constant 0 : i32
    return %arg0, %c0_i32 : i32, i32
  }
}

</mosaic_0001>

<llo_original>
// kernel: rnn_forward.1
$region0: #{rnn_forward.1}
  #allocation0 [shape = 'u32[]', space=smem, size = 0x4, offset = 0x4, fixed_abs, tag = 'smem constant byte address 0x4 - core index']
  #allocation1 [shape = 'u32[144,128]{1,0:T(1,128)}', space=vmem, size = 0x12000, scoped, tag = 'internal scratch']
  #allocation2 [shape = 'f32[64,32]{1,0:T(8,128)}', space=vmem, size = 0x8000, scoped, tag = 'scratch operand']
  %s0 = inlined_call_operand.vmem [shape: f32[8,8,16], index: 0, kind: input, shape index: {}]
  %s1 = inlined_call_operand.vmem [shape: f32[16,32], index: 1, kind: input, shape index: {}]
  %s2 = inlined_call_operand.vmem [shape: f32[32,32], index: 2, kind: input, shape index: {}]
  %s3 = inlined_call_operand.vmem [shape: f32[1,32], index: 3, kind: input, shape index: {}]
  %s4 = inlined_call_operand.vmem [shape: f32[32,32], index: 4, kind: input, shape index: {}]
  %s5 = inlined_call_operand.vmem [shape: f32[32,32], index: 5, kind: input, shape index: {}]
  %s6 = inlined_call_operand.vmem [shape: f32[1,32], index: 6, kind: input, shape index: {}]
  %s7 = inlined_call_operand.vmem [shape: f32[32,128], index: 7, kind: input, shape index: {}]
  %s8 = inlined_call_operand.vmem [shape: f32[1,128], index: 8, kind: input, shape index: {}]
  %s9 = inlined_call_operand.vmem [shape: f32[8,128], index: 9, kind: output, shape index: {}]
  %s10 = sld [smem:[#allocation0]]
  $region46: #{rnn_forward.1} parent=0
    _
  %s12 = ssub.s32 1, %s10
  %s13 = scalar_select 0, %s12, %s10
  // Predicated region
  $region2: #{rnn_forward.1} parent=0 // pred_check
    _
  $region3: #{rnn_forward.1} parent=0 // pred_check_branch
    %15 = sbr.rel (0) target = $region5
  $region4: #{rnn_forward.1} parent=0 // pred_region
    _
  $region5: #{rnn_forward.1} parent=0 // pred_fallthru
    _
  // Predicated region
  $region6: #{rnn_forward.1} parent=0 // pred_check
    _
  $region7: #{rnn_forward.1} parent=0 // pred_check_branch
    %17 = sbr.rel (0) target = $region9
  $region8: #{rnn_forward.1} parent=0 // pred_region
    _
  $region9: #{rnn_forward.1} parent=0 // pred_fallthru
    _
  // Predicated region
  $region10: #{rnn_forward.1} parent=0 // pred_check
    _
  $region11: #{rnn_forward.1} parent=0 // pred_check_branch
    %19 = sbr.rel (0) target = $region13
  $region12: #{rnn_forward.1} parent=0 // pred_region
    _
  $region13: #{rnn_forward.1} parent=0 // pred_fallthru
    _
  // Predicated region
  $region14: #{rnn_forward.1} parent=0 // pred_check
    _
  $region15: #{rnn_forward.1} parent=0 // pred_check_branch
    %21 = sbr.rel (0) target = $region17
  $region16: #{rnn_forward.1} parent=0 // pred_region
    _
  $region17: #{rnn_forward.1} parent=0 // pred_fallthru
    _
  // Predicated region
  $region18: #{rnn_forward.1} parent=0 // pred_check
    _
  $region19: #{rnn_forward.1} parent=0 // pred_check_branch
    %23 = sbr.rel (0) target = $region21
  $region20: #{rnn_forward.1} parent=0 // pred_region
    _
  $region21: #{rnn_forward.1} parent=0 // pred_fallthru
    _
  // Predicated region
  $region22: #{rnn_forward.1} parent=0 // pred_check
    _
  $region23: #{rnn_forward.1} parent=0 // pred_check_branch
    %25 = sbr.rel (0) target = $region25
  $region24: #{rnn_forward.1} parent=0 // pred_region
    _
  $region25: #{rnn_forward.1} parent=0 // pred_fallthru
    _
  // Predicated region
  $region26: #{rnn_forward.1} parent=0 // pred_check
    _
  $region27: #{rnn_forward.1} parent=0 // pred_check_branch
    %27 = sbr.rel (0) target = $region29
  $region28: #{rnn_forward.1} parent=0 // pred_region
    _
  $region29: #{rnn_forward.1} parent=0 // pred_fallthru
    _
  // Predicated region
  $region30: #{rnn_forward.1} parent=0 // pred_check
    _
  $region31: #{rnn_forward.1} parent=0 // pred_check_branch
    %29 = sbr.rel (0) target = $region33
  $region32: #{rnn_forward.1} parent=0 // pred_region
    _
  $region33: #{rnn_forward.1} parent=0 // pred_fallthru
    _
  // Predicated region
  $region34: #{rnn_forward.1} parent=0 // pred_check
    _
  $region35: #{rnn_forward.1} parent=0 // pred_check_branch
    %31 = sbr.rel (0) target = $region37
  $region36: #{rnn_forward.1} parent=0 // pred_region
    _
  $region37: #{rnn_forward.1} parent=0 // pred_fallthru
    _
  %v32 = vld [vmem:[%s0] sm:$0xff]
  %v33 = vld [vmem:[%s0 + $0x8] sm:$0xff]
  %v34 = vld [vmem:[%s0 + $0x10] sm:$0xff]
  %v35 = vld [vmem:[%s0 + $0x18] sm:$0xff]
  %v36 = vld [vmem:[%s0 + $0x20] sm:$0xff]
  %v37 = vld [vmem:[%s0 + $0x28] sm:$0xff]
  %v38 = vld [vmem:[%s0 + $0x30] sm:$0xff]
  %v39 = vld [vmem:[%s0 + $0x38] sm:$0xff]
  %v40 = vld [vmem:[%s1] sm:$0xff]
  %v41 = vld [vmem:[%s1 + $0x8] sm:$0xff]
  %v42 = vld [vmem:[%s3] sm:$0x1]
  %v44 = vlaneseq
  %v45 = vshrl.u32 %v44, 7
  %v46 = vsub.s32 0, %v45
  %v47 = vrot.slane %v42, %v46
  %vm49 = vcmask 130048
  %v51 = vsel %vm49, %v32, 0
  %v54 = vsel %vm49, %v33, 0
  %v57 = vsel %vm49, %v34, 0
  %v60 = vsel %vm49, %v35, 0
  %v63 = vsel %vm49, %v36, 0
  %v66 = vsel %vm49, %v37, 0
  %v69 = vsel %vm49, %v38, 0
  %v72 = vsel %vm49, %v39, 0
  %74 = vmatprep.subr.mxu0 0.0
  %75 = vmatpush1.msra.mxu0 0.0
  %76 = vmatprep.subr.mxu0 0.0
  %77 = vmatpush1.msra.mxu0 0.0
  %78 = vmatprep.subr.mxu0 0.0
  %79 = vmatpush1.msra.mxu0 0.0
  %80 = vmatprep.subr.mxu0 0.0
  %81 = vmatpush1.msra.mxu0 0.0
  %82 = vmatprep.subr.mxu0 0.0
  %83 = vmatpush1.msra.mxu0 0.0
  %84 = vmatprep.subr.mxu0 0.0
  %85 = vmatpush1.msra.mxu0 0.0
  %86 = vmatprep.subr.mxu0 0.0
  %87 = vmatpush1.msra.mxu0 0.0
  %88 = vmatprep.subr.mxu0 0.0
  %89 = vmatpush1.msra.mxu0 0.0
  %90 = vmatprep.subr.mxu0 0.0
  %91 = vmatpush1.msra.mxu0 0.0
  %92 = vmatprep.subr.mxu0 0.0
  %93 = vmatpush1.msra.mxu0 0.0
  %94 = vmatprep.subr.mxu0 0.0
  %95 = vmatpush1.msra.mxu0 0.0
  %96 = vmatprep.subr.mxu0 0.0
  %97 = vmatpush1.msra.mxu0 0.0
  %98 = vmatprep.subr.mxu0 0.0
  %99 = vmatpush1.msra.mxu0 0.0
  %100 = vmatprep.subr.mxu0 0.0
  %101 = vmatpush1.msra.mxu0 0.0
  %102 = vmatprep.subr.mxu0 0.0
  %103 = vmatpush1.msra.mxu0 %v41
  %104 = vmatprep.subr.mxu0 0.0
  %105 = vmatpush1.msra.mxu0 %v40
  %106 = vmatprep.subr.mxu0 0.0
  %107 = vmatpush2.msra.mxu0 0.0
  %108 = vmatprep.subr.mxu0 0.0
  %109 = vmatpush2.msra.mxu0 0.0
  %110 = vmatprep.subr.mxu0 0.0
  %111 = vmatpush2.msra.mxu0 0.0
  %112 = vmatprep.subr.mxu0 0.0
  %113 = vmatpush2.msra.mxu0 0.0
  %114 = vmatprep.subr.mxu0 0.0
  %115 = vmatpush2.msra.mxu0 0.0
  %116 = vmatprep.subr.mxu0 0.0
  %117 = vmatpush2.msra.mxu0 0.0
  %118 = vmatprep.subr.mxu0 0.0
  %119 = vmatpush2.msra.mxu0 0.0
  %120 = vmatprep.subr.mxu0 0.0
  %121 = vmatpush2.msra.mxu0 0.0
  %122 = vmatprep.subr.mxu0 0.0
  %123 = vmatpush2.msra.mxu0 0.0
  %124 = vmatprep.subr.mxu0 0.0
  %125 = vmatpush2.msra.mxu0 0.0
  %126 = vmatprep.subr.mxu0 0.0
  %127 = vmatpush2.msra.mxu0 0.0
  %128 = vmatprep.subr.mxu0 0.0
  %129 = vmatpush2.msra.mxu0 0.0
  %130 = vmatprep.subr.mxu0 0.0
  %131 = vmatpush2.msra.mxu0 0.0
  %132 = vmatprep.subr.mxu0 0.0
  %133 = vmatpush2.msra.mxu0 0.0
  %134 = vmatprep.subr.mxu0 0.0
  %135 = vmatpush2.msra.mxu0 0.0
  %136 = vmatprep.subr.mxu0 0.0
  %137 = vmatpush2.msra.mxu0 0.0
  %138 = vmatprep.mubr.f32.mxu0 0.0
  %139 = vmatmul.mubr.f32.gmra.mxu0 %v51
  %v140 = vpop.f32.mrf.mxu0
  %v141 = vadd.f32 %v47, %v140
  %v142 = vpop.f32.mrf.mxu0
  %143 = vmatprep.mubr.f32.mxu0 0.0
  %144 = vmatmul.mubr.f32.gmra.mxu0 %v54
  %v145 = vpop.f32.mrf.mxu0
  %v146 = vadd.f32 %v47, %v145
  %v147 = vpop.f32.mrf.mxu0
  %148 = vmatprep.mubr.f32.mxu0 0.0
  %149 = vmatmul.mubr.f32.gmra.mxu0 %v57
  %v150 = vpop.f32.mrf.mxu0
  %v151 = vadd.f32 %v47, %v150
  %v152 = vpop.f32.mrf.mxu0
  %153 = vmatprep.mubr.f32.mxu0 0.0
  %154 = vmatmul.mubr.f32.gmra.mxu0 %v60
  %v155 = vpop.f32.mrf.mxu0
  %v156 = vadd.f32 %v47, %v155
  %v157 = vpop.f32.mrf.mxu0
  %158 = vmatprep.mubr.f32.mxu0 0.0
  %159 = vmatmul.mubr.f32.gmra.mxu0 %v63
  %v160 = vpop.f32.mrf.mxu0
  %v161 = vadd.f32 %v47, %v160
  %v162 = vpop.f32.mrf.mxu0
  %163 = vmatprep.mubr.f32.mxu0 0.0
  %164 = vmatmul.mubr.f32.gmra.mxu0 %v66
  %v165 = vpop.f32.mrf.mxu0
  %v166 = vadd.f32 %v47, %v165
  %v167 = vpop.f32.mrf.mxu0
  %168 = vmatprep.mubr.f32.mxu0 0.0
  %169 = vmatmul.mubr.f32.gmra.mxu0 %v69
  %v170 = vpop.f32.mrf.mxu0
  %v171 = vadd.f32 %v47, %v170
  %v172 = vpop.f32.mrf.mxu0
  %173 = vmatprep.mubr.f32.mxu0 0.0
  %174 = vmatmul.mubr.f32.gmra.mxu0 %v72
  %v175 = vpop.f32.mrf.mxu0
  %v176 = vadd.f32 %v47, %v175
  %v177 = vpop.f32.mrf.mxu0
  %178 = vdwg.mxu0
  %vm179 = vcmask 261120
  %180 = vst.msk [vmem:[#allocation2] sm:$0xff] %vm179, %v141
  %181 = vst.msk [vmem:[#allocation2 + $0x8] sm:$0xff] %vm179, %v146
  %182 = vst.msk [vmem:[#allocation2 + $0x10] sm:$0xff] %vm179, %v151
  %183 = vst.msk [vmem:[#allocation2 + $0x18] sm:$0xff] %vm179, %v156
  %184 = vst.msk [vmem:[#allocation2 + $0x20] sm:$0xff] %vm179, %v161
  %185 = vst.msk [vmem:[#allocation2 + $0x28] sm:$0xff] %vm179, %v166
  %186 = vst.msk [vmem:[#allocation2 + $0x30] sm:$0xff] %vm179, %v171
  %187 = vst.msk [vmem:[#allocation2 + $0x38] sm:$0xff] %vm179, %v176
  %v188 = vld [vmem:[#allocation2] sm:$0xff]
  %v189 = vld [vmem:[%s2] sm:$0xff]
  %v190 = vld [vmem:[%s2 + $0x8] sm:$0xff]
  %v191 = vld [vmem:[%s2 + $0x10] sm:$0xff]
  %v192 = vld [vmem:[%s2 + $0x18] sm:$0xff]
  %v194 = vsel %vm179, 0.0, 0
  %196 = vmatprep.subr.mxu0 0.0
  %197 = vmatpush1.msra.mxu0 0.0
  %198 = vmatprep.subr.mxu0 0.0
  %199 = vmatpush1.msra.mxu0 0.0
  %200 = vmatprep.subr.mxu0 0.0
  %201 = vmatpush1.msra.mxu0 0.0
  %202 = vmatprep.subr.mxu0 0.0
  %203 = vmatpush1.msra.mxu0 0.0
  %204 = vmatprep.subr.mxu0 0.0
  %205 = vmatpush1.msra.mxu0 0.0
  %206 = vmatprep.subr.mxu0 0.0
  %207 = vmatpush1.msra.mxu0 0.0
  %208 = vmatprep.subr.mxu0 0.0
  %209 = vmatpush1.msra.mxu0 0.0
  %210 = vmatprep.subr.mxu0 0.0
  %211 = vmatpush1.msra.mxu0 0.0
  %212 = vmatprep.subr.mxu0 0.0
  %213 = vmatpush1.msra.mxu0 0.0
  %214 = vmatprep.subr.mxu0 0.0
  %215 = vmatpush1.msra.mxu0 0.0
  %216 = vmatprep.subr.mxu0 0.0
  %217 = vmatpush1.msra.mxu0 0.0
  %218 = vmatprep.subr.mxu0 0.0
  %219 = vmatpush1.msra.mxu0 0.0
  %220 = vmatprep.subr.mxu0 0.0
  %221 = vmatpush1.msra.mxu0 %v192
  %222 = vmatprep.subr.mxu0 0.0
  %223 = vmatpush1.msra.mxu0 %v191
  %224 = vmatprep.subr.mxu0 0.0
  %225 = vmatpush1.msra.mxu0 %v190
  %226 = vmatprep.subr.mxu0 0.0
  %227 = vmatpush1.msra.mxu0 %v189
  %228 = vmatprep.subr.mxu0 0.0
  %229 = vmatpush2.msra.mxu0 0.0
  %230 = vmatprep.subr.mxu0 0.0
  %231 = vmatpush2.msra.mxu0 0.0
  %232 = vmatprep.subr.mxu0 0.0
  %233 = vmatpush2.msra.mxu0 0.0
  %234 = vmatprep.subr.mxu0 0.0
  %235 = vmatpush2.msra.mxu0 0.0
  %236 = vmatprep.subr.mxu0 0.0
  %237 = vmatpush2.msra.mxu0 0.0
  %238 = vmatprep.subr.mxu0 0.0
  %239 = vmatpush2.msra.mxu0 0.0
  %240 = vmatprep.subr.mxu0 0.0
  %241 = vmatpush2.msra.mxu0 0.0
  %242 = vmatprep.subr.mxu0 0.0
  %243 = vmatpush2.msra.mxu0 0.0
  %244 = vmatprep.subr.mxu0 0.0
  %245 = vmatpush2.msra.mxu0 0.0
  %246 = vmatprep.subr.mxu0 0.0
  %247 = vmatpush2.msra.mxu0 0.0
  %248 = vmatprep.subr.mxu0 0.0
  %249 = vmatpush2.msra.mxu0 0.0
  %250 = vmatprep.subr.mxu0 0.0
  %251 = vmatpush2.msra.mxu0 0.0
  %252 = vmatprep.subr.mxu0 0.0
  %253 = vmatpush2.msra.mxu0 0.0
  %254 = vmatprep.subr.mxu0 0.0
  %255 = vmatpush2.msra.mxu0 0.0
  %256 = vmatprep.subr.mxu0 0.0
  %257 = vmatpush2.msra.mxu0 0.0
  %258 = vmatprep.subr.mxu0 0.0
  %259 = vmatpush2.msra.mxu0 0.0
  %260 = vmatprep.mubr.f32.mxu0 0.0
  %261 = vmatmul.mubr.f32.gmra.mxu0 %v194
  %v262 = vpop.f32.mrf.mxu0
  %v263 = vadd.f32 0.0, %v262
  %v264 = vpop.f32.mrf.mxu0
  %265 = vdwg.mxu0
  %v266 = vadd.f32 %v188, %v263
  %v267 = vtanh.pop %v266
  %v268 = vld [vmem:[%s4] sm:$0xff]
  %v269 = vld [vmem:[%s4 + $0x8] sm:$0xff]
  %v270 = vld [vmem:[%s4 + $0x10] sm:$0xff]
  %v271 = vld [vmem:[%s4 + $0x18] sm:$0xff]
  %v272 = vld [vmem:[%s5] sm:$0xff]
  %v273 = vld [vmem:[%s5 + $0x8] sm:$0xff]
  %v274 = vld [vmem:[%s5 + $0x10] sm:$0xff]
  %v275 = vld [vmem:[%s5 + $0x18] sm:$0xff]
  %v276 = vld [vmem:[%s6] sm:$0x1]
  %277 = vmatprep.subr.mxu0 0.0
  %278 = vmatpush1.msra.mxu0 0.0
  %279 = vmatprep.subr.mxu0 0.0
  %280 = vmatpush1.msra.mxu0 0.0
  %281 = vmatprep.subr.mxu0 0.0
  %282 = vmatpush1.msra.mxu0 0.0
  %283 = vmatprep.subr.mxu0 0.0
  %284 = vmatpush1.msra.mxu0 0.0
  %285 = vmatprep.subr.mxu0 0.0
  %286 = vmatpush1.msra.mxu0 0.0
  %287 = vmatprep.subr.mxu0 0.0
  %288 = vmatpush1.msra.mxu0 0.0
  %289 = vmatprep.subr.mxu0 0.0
  %290 = vmatpush1.msra.mxu0 0.0
  %291 = vmatprep.subr.mxu0 0.0
  %292 = vmatpush1.msra.mxu0 0.0
  %293 = vmatprep.subr.mxu0 0.0
  %294 = vmatpush1.msra.mxu0 0.0
  %295 = vmatprep.subr.mxu0 0.0
  %296 = vmatpush1.msra.mxu0 0.0
  %297 = vmatprep.subr.mxu0 0.0
  %298 = vmatpush1.msra.mxu0 0.0
  %299 = vmatprep.subr.mxu0 0.0
  %300 = vmatpush1.msra.mxu0 0.0
  %301 = vmatprep.subr.mxu0 0.0
  %302 = vmatpush1.msra.mxu0 %v275
  %303 = vmatprep.subr.mxu0 0.0
  %304 = vmatpush1.msra.mxu0 %v274
  %305 = vmatprep.subr.mxu0 0.0
  %306 = vmatpush1.msra.mxu0 %v273
  %307 = vmatprep.subr.mxu0 0.0
  %308 = vmatpush1.msra.mxu0 %v272
  %309 = vmatprep.subr.mxu0 0.0
  %310 = vmatpush2.msra.mxu0 0.0
  %311 = vmatprep.subr.mxu0 0.0
  %312 = vmatpush2.msra.mxu0 0.0
  %313 = vmatprep.subr.mxu0 0.0
  %314 = vmatpush2.msra.mxu0 0.0
  %315 = vmatprep.subr.mxu0 0.0
  %316 = vmatpush2.msra.mxu0 0.0
  %317 = vmatprep.subr.mxu0 0.0
  %318 = vmatpush2.msra.mxu0 0.0
  %319 = vmatprep.subr.mxu0 0.0
  %320 = vmatpush2.msra.mxu0 0.0
  %321 = vmatprep.subr.mxu0 0.0
  %322 = vmatpush2.msra.mxu0 0.0
  %323 = vmatprep.subr.mxu0 0.0
  %324 = vmatpush2.msra.mxu0 0.0
  %325 = vmatprep.subr.mxu0 0.0
  %326 = vmatpush2.msra.mxu0 0.0
  %327 = vmatprep.subr.mxu0 0.0
  %328 = vmatpush2.msra.mxu0 0.0
  %329 = vmatprep.subr.mxu0 0.0
  %330 = vmatpush2.msra.mxu0 0.0
  %331 = vmatprep.subr.mxu0 0.0
  %332 = vmatpush2.msra.mxu0 0.0
  %333 = vmatprep.subr.mxu0 0.0
  %334 = vmatpush2.msra.mxu0 0.0
  %335 = vmatprep.subr.mxu0 0.0
  %336 = vmatpush2.msra.mxu0 0.0
  %337 = vmatprep.subr.mxu0 0.0
  %338 = vmatpush2.msra.mxu0 0.0
  %339 = vmatprep.subr.mxu0 0.0
  %340 = vmatpush2.msra.mxu0 0.0
  %341 = vmatprep.mubr.f32.mxu0 0.0
  %342 = vmatmul.mubr.f32.gmra.mxu0 %v194
  %v343 = vpop.f32.mrf.mxu0
  %v344 = vadd.f32 0.0, %v343
  %v345 = vpop.f32.mrf.mxu0
  %346 = vdwg.mxu0
  %v348 = vsel %vm179, %v267, 0
  %350 = vmatprep.subr.mxu0 0.0
  %351 = vmatpush1.msra.mxu0 0.0
  %352 = vmatprep.subr.mxu0 0.0
  %353 = vmatpush1.msra.mxu0 0.0
  %354 = vmatprep.subr.mxu0 0.0
  %355 = vmatpush1.msra.mxu0 0.0
  %356 = vmatprep.subr.mxu0 0.0
  %357 = vmatpush1.msra.mxu0 0.0
  %358 = vmatprep.subr.mxu0 0.0
  %359 = vmatpush1.msra.mxu0 0.0
  %360 = vmatprep.subr.mxu0 0.0
  %361 = vmatpush1.msra.mxu0 0.0
  %362 = vmatprep.subr.mxu0 0.0
  %363 = vmatpush1.msra.mxu0 0.0
  %364 = vmatprep.subr.mxu0 0.0
  %365 = vmatpush1.msra.mxu0 0.0
  %366 = vmatprep.subr.mxu0 0.0
  %367 = vmatpush1.msra.mxu0 0.0
  %368 = vmatprep.subr.mxu0 0.0
  %369 = vmatpush1.msra.mxu0 0.0
  %370 = vmatprep.subr.mxu0 0.0
  %371 = vmatpush1.msra.mxu0 0.0
  %372 = vmatprep.subr.mxu0 0.0
  %373 = vmatpush1.msra.mxu0 0.0
  %374 = vmatprep.subr.mxu0 0.0
  %375 = vmatpush1.msra.mxu0 %v271
  %376 = vmatprep.subr.mxu0 0.0
  %377 = vmatpush1.msra.mxu0 %v270
  %378 = vmatprep.subr.mxu0 0.0
  %379 = vmatpush1.msra.mxu0 %v269
  %380 = vmatprep.subr.mxu0 0.0
  %381 = vmatpush1.msra.mxu0 %v268
  %382 = vmatprep.subr.mxu0 0.0
  %383 = vmatpush2.msra.mxu0 0.0
  %384 = vmatprep.subr.mxu0 0.0
  %385 = vmatpush2.msra.mxu0 0.0
  %386 = vmatprep.subr.mxu0 0.0
  %387 = vmatpush2.msra.mxu0 0.0
  %388 = vmatprep.subr.mxu0 0.0
  %389 = vmatpush2.msra.mxu0 0.0
  %390 = vmatprep.subr.mxu0 0.0
  %391 = vmatpush2.msra.mxu0 0.0
  %392 = vmatprep.subr.mxu0 0.0
  %393 = vmatpush2.msra.mxu0 0.0
  %394 = vmatprep.subr.mxu0 0.0
  %395 = vmatpush2.msra.mxu0 0.0
  %396 = vmatprep.subr.mxu0 0.0
  %397 = vmatpush2.msra.mxu0 0.0
  %398 = vmatprep.subr.mxu0 0.0
  %399 = vmatpush2.msra.mxu0 0.0
  %400 = vmatprep.subr.mxu0 0.0
  %401 = vmatpush2.msra.mxu0 0.0
  %402 = vmatprep.subr.mxu0 0.0
  %403 = vmatpush2.msra.mxu0 0.0
  %404 = vmatprep.subr.mxu0 0.0
  %405 = vmatpush2.msra.mxu0 0.0
  %406 = vmatprep.subr.mxu0 0.0
  %407 = vmatpush2.msra.mxu0 0.0
  %408 = vmatprep.subr.mxu0 0.0
  %409 = vmatpush2.msra.mxu0 0.0
  %410 = vmatprep.subr.mxu0 0.0
  %411 = vmatpush2.msra.mxu0 0.0
  %412 = vmatprep.subr.mxu0 0.0
  %413 = vmatpush2.msra.mxu0 0.0
  %414 = vmatprep.mubr.f32.mxu0 0.0
  %415 = vmatmul.mubr.f32.gmra.mxu0 %v348
  %v416 = vpop.f32.mrf.mxu0
  %v417 = vadd.f32 %v344, %v416
  %v418 = vpop.f32.mrf.mxu0
  %419 = vdwg.mxu0
  %v421 = vlaneseq
  %v422 = vshrl.u32 %v421, 7
  %v423 = vsub.s32 0, %v422
  %v424 = vrot.slane %v276, %v423
  %v426 = vadd.f32 %v417, %v424
  %v427 = vtanh.pop %v426
  %s428 = scalar_lea.vmem [#allocation2], 8
  %v429 = vld [vmem:[%s428] sm:$0xff]
  %430 = vmatprep.subr.mxu0 0.0
  %431 = vmatpush1.msra.mxu0 0.0
  %432 = vmatprep.subr.mxu0 0.0
  %433 = vmatpush1.msra.mxu0 0.0
  %434 = vmatprep.subr.mxu0 0.0
  %435 = vmatpush1.msra.mxu0 0.0
  %436 = vmatprep.subr.mxu0 0.0
  %437 = vmatpush1.msra.mxu0 0.0
  %438 = vmatprep.subr.mxu0 0.0
  %439 = vmatpush1.msra.mxu0 0.0
  %440 = vmatprep.subr.mxu0 0.0
  %441 = vmatpush1.msra.mxu0 0.0
  %442 = vmatprep.subr.mxu0 0.0
  %443 = vmatpush1.msra.mxu0 0.0
  %444 = vmatprep.subr.mxu0 0.0
  %445 = vmatpush1.msra.mxu0 0.0
  %446 = vmatprep.subr.mxu0 0.0
  %447 = vmatpush1.msra.mxu0 0.0
  %448 = vmatprep.subr.mxu0 0.0
  %449 = vmatpush1.msra.mxu0 0.0
  %450 = vmatprep.subr.mxu0 0.0
  %451 = vmatpush1.msra.mxu0 0.0
  %452 = vmatprep.subr.mxu0 0.0
  %453 = vmatpush1.msra.mxu0 0.0
  %454 = vmatprep.subr.mxu0 0.0
  %455 = vmatpush1.msra.mxu0 %v192
  %456 = vmatprep.subr.mxu0 0.0
  %457 = vmatpush1.msra.mxu0 %v191
  %458 = vmatprep.subr.mxu0 0.0
  %459 = vmatpush1.msra.mxu0 %v190
  %460 = vmatprep.subr.mxu0 0.0
  %461 = vmatpush1.msra.mxu0 %v189
  %462 = vmatprep.subr.mxu0 0.0
  %463 = vmatpush2.msra.mxu0 0.0
  %464 = vmatprep.subr.mxu0 0.0
  %465 = vmatpush2.msra.mxu0 0.0
  %466 = vmatprep.subr.mxu0 0.0
  %467 = vmatpush2.msra.mxu0 0.0
  %468 = vmatprep.subr.mxu0 0.0
  %469 = vmatpush2.msra.mxu0 0.0
  %470 = vmatprep.subr.mxu0 0.0
  %471 = vmatpush2.msra.mxu0 0.0
  %472 = vmatprep.subr.mxu0 0.0
  %473 = vmatpush2.msra.mxu0 0.0
  %474 = vmatprep.subr.mxu0 0.0
  %475 = vmatpush2.msra.mxu0 0.0
  %476 = vmatprep.subr.mxu0 0.0
  %477 = vmatpush2.msra.mxu0 0.0
  %478 = vmatprep.subr.mxu0 0.0
  %479 = vmatpush2.msra.mxu0 0.0
  %480 = vmatprep.subr.mxu0 0.0
  %481 = vmatpush2.msra.mxu0 0.0
  %482 = vmatprep.subr.mxu0 0.0
  %483 = vmatpush2.msra.mxu0 0.0
  %484 = vmatprep.subr.mxu0 0.0
  %485 = vmatpush2.msra.mxu0 0.0
  %486 = vmatprep.subr.mxu0 0.0
  %487 = vmatpush2.msra.mxu0 0.0
  %488 = vmatprep.subr.mxu0 0.0
  %489 = vmatpush2.msra.mxu0 0.0
  %490 = vmatprep.subr.mxu0 0.0
  %491 = vmatpush2.msra.mxu0 0.0
  %492 = vmatprep.subr.mxu0 0.0
  %493 = vmatpush2.msra.mxu0 0.0
  %494 = vmatprep.mubr.f32.mxu0 0.0
  %495 = vmatmul.mubr.f32.gmra.mxu0 %v348
  %v496 = vpop.f32.mrf.mxu0
  %v497 = vadd.f32 0.0, %v496
  %v498 = vpop.f32.mrf.mxu0
  %499 = vdwg.mxu0
  %v500 = vadd.f32 %v429, %v497
  %v501 = vtanh.pop %v500
  %v503 = vsel %vm179, %v427, 0
  %505 = vmatprep.subr.mxu0 0.0
  %506 = vmatpush1.msra.mxu0 0.0
  %507 = vmatprep.subr.mxu0 0.0
  %508 = vmatpush1.msra.mxu0 0.0
  %509 = vmatprep.subr.mxu0 0.0
  %510 = vmatpush1.msra.mxu0 0.0
  %511 = vmatprep.subr.mxu0 0.0
  %512 = vmatpush1.msra.mxu0 0.0
  %513 = vmatprep.subr.mxu0 0.0
  %514 = vmatpush1.msra.mxu0 0.0
  %515 = vmatprep.subr.mxu0 0.0
  %516 = vmatpush1.msra.mxu0 0.0
  %517 = vmatprep.subr.mxu0 0.0
  %518 = vmatpush1.msra.mxu0 0.0
  %519 = vmatprep.subr.mxu0 0.0
  %520 = vmatpush1.msra.mxu0 0.0
  %521 = vmatprep.subr.mxu0 0.0
  %522 = vmatpush1.msra.mxu0 0.0
  %523 = vmatprep.subr.mxu0 0.0
  %524 = vmatpush1.msra.mxu0 0.0
  %525 = vmatprep.subr.mxu0 0.0
  %526 = vmatpush1.msra.mxu0 0.0
  %527 = vmatprep.subr.mxu0 0.0
  %528 = vmatpush1.msra.mxu0 0.0
  %529 = vmatprep.subr.mxu0 0.0
  %530 = vmatpush1.msra.mxu0 %v275
  %531 = vmatprep.subr.mxu0 0.0
  %532 = vmatpush1.msra.mxu0 %v274
  %533 = vmatprep.subr.mxu0 0.0
  %534 = vmatpush1.msra.mxu0 %v273
  %535 = vmatprep.subr.mxu0 0.0
  %536 = vmatpush1.msra.mxu0 %v272
  %537 = vmatprep.subr.mxu0 0.0
  %538 = vmatpush2.msra.mxu0 0.0
  %539 = vmatprep.subr.mxu0 0.0
  %540 = vmatpush2.msra.mxu0 0.0
  %541 = vmatprep.subr.mxu0 0.0
  %542 = vmatpush2.msra.mxu0 0.0
  %543 = vmatprep.subr.mxu0 0.0
  %544 = vmatpush2.msra.mxu0 0.0
  %545 = vmatprep.subr.mxu0 0.0
  %546 = vmatpush2.msra.mxu0 0.0
  %547 = vmatprep.subr.mxu0 0.0
  %548 = vmatpush2.msra.mxu0 0.0
  %549 = vmatprep.subr.mxu0 0.0
  %550 = vmatpush2.msra.mxu0 0.0
  %551 = vmatprep.subr.mxu0 0.0
  %552 = vmatpush2.msra.mxu0 0.0
  %553 = vmatprep.subr.mxu0 0.0
  %554 = vmatpush2.msra.mxu0 0.0
  %555 = vmatprep.subr.mxu0 0.0
  %556 = vmatpush2.msra.mxu0 0.0
  %557 = vmatprep.subr.mxu0 0.0
  %558 = vmatpush2.msra.mxu0 0.0
  %559 = vmatprep.subr.mxu0 0.0
  %560 = vmatpush2.msra.mxu0 0.0
  %561 = vmatprep.subr.mxu0 0.0
  %562 = vmatpush2.msra.mxu0 0.0
  %563 = vmatprep.subr.mxu0 0.0
  %564 = vmatpush2.msra.mxu0 0.0
  %565 = vmatprep.subr.mxu0 0.0
  %566 = vmatpush2.msra.mxu0 0.0
  %567 = vmatprep.subr.mxu0 0.0
  %568 = vmatpush2.msra.mxu0 0.0
  %569 = vmatprep.mubr.f32.mxu0 0.0
  %570 = vmatmul.mubr.f32.gmra.mxu0 %v503
  %v571 = vpop.f32.mrf.mxu0
  %v572 = vadd.f32 0.0, %v571
  %v573 = vpop.f32.mrf.mxu0
  %574 = vdwg.mxu0
  %v576 = vsel %vm179, %v501, 0
  %578 = vmatprep.subr.mxu0 0.0
  %579 = vmatpush1.msra.mxu0 0.0
  %580 = vmatprep.subr.mxu0 0.0
  %581 = vmatpush1.msra.mxu0 0.0
  %582 = vmatprep.subr.mxu0 0.0
  %583 = vmatpush1.msra.mxu0 0.0
  %584 = vmatprep.subr.mxu0 0.0
  %585 = vmatpush1.msra.mxu0 0.0
  %586 = vmatprep.subr.mxu0 0.0
  %587 = vmatpush1.msra.mxu0 0.0
  %588 = vmatprep.subr.mxu0 0.0
  %589 = vmatpush1.msra.mxu0 0.0
  %590 = vmatprep.subr.mxu0 0.0
  %591 = vmatpush1.msra.mxu0 0.0
  %592 = vmatprep.subr.mxu0 0.0
  %593 = vmatpush1.msra.mxu0 0.0
  %594 = vmatprep.subr.mxu0 0.0
  %595 = vmatpush1.msra.mxu0 0.0
  %596 = vmatprep.subr.mxu0 0.0
  %597 = vmatpush1.msra.mxu0 0.0
  %598 = vmatprep.subr.mxu0 0.0
  %599 = vmatpush1.msra.mxu0 0.0
  %600 = vmatprep.subr.mxu0 0.0
  %601 = vmatpush1.msra.mxu0 0.0
  %602 = vmatprep.subr.mxu0 0.0
  %603 = vmatpush1.msra.mxu0 %v271
  %604 = vmatprep.subr.mxu0 0.0
  %605 = vmatpush1.msra.mxu0 %v270
  %606 = vmatprep.subr.mxu0 0.0
  %607 = vmatpush1.msra.mxu0 %v269
  %608 = vmatprep.subr.mxu0 0.0
  %609 = vmatpush1.msra.mxu0 %v268
  %610 = vmatprep.subr.mxu0 0.0
  %611 = vmatpush2.msra.mxu0 0.0
  %612 = vmatprep.subr.mxu0 0.0
  %613 = vmatpush2.msra.mxu0 0.0
  %614 = vmatprep.subr.mxu0 0.0
  %615 = vmatpush2.msra.mxu0 0.0
  %616 = vmatprep.subr.mxu0 0.0
  %617 = vmatpush2.msra.mxu0 0.0
  %618 = vmatprep.subr.mxu0 0.0
  %619 = vmatpush2.msra.mxu0 0.0
  %620 = vmatprep.subr.mxu0 0.0
  %621 = vmatpush2.msra.mxu0 0.0
  %622 = vmatprep.subr.mxu0 0.0
  %623 = vmatpush2.msra.mxu0 0.0
  %624 = vmatprep.subr.mxu0 0.0
  %625 = vmatpush2.msra.mxu0 0.0
  %626 = vmatprep.subr.mxu0 0.0
  %627 = vmatpush2.msra.mxu0 0.0
  %628 = vmatprep.subr.mxu0 0.0
  %629 = vmatpush2.msra.mxu0 0.0
  %630 = vmatprep.subr.mxu0 0.0
  %631 = vmatpush2.msra.mxu0 0.0
  %632 = vmatprep.subr.mxu0 0.0
  %633 = vmatpush2.msra.mxu0 0.0
  %634 = vmatprep.subr.mxu0 0.0
  %635 = vmatpush2.msra.mxu0 0.0
  %636 = vmatprep.subr.mxu0 0.0
  %637 = vmatpush2.msra.mxu0 0.0
  %638 = vmatprep.subr.mxu0 0.0
  %639 = vmatpush2.msra.mxu0 0.0
  %640 = vmatprep.subr.mxu0 0.0
  %641 = vmatpush2.msra.mxu0 0.0
  %642 = vmatprep.mubr.f32.mxu0 0.0
  %643 = vmatmul.mubr.f32.gmra.mxu0 %v576
  %v644 = vpop.f32.mrf.mxu0
  %v645 = vadd.f32 %v572, %v644
  %v646 = vpop.f32.mrf.mxu0
  %647 = vdwg.mxu0
  %v648 = vadd.f32 %v645, %v424
  %v649 = vtanh.pop %v648
  %s650 = scalar_lea.vmem [#allocation2], 16
  %v651 = vld [vmem:[%s650] sm:$0xff]
  %652 = vmatprep.subr.mxu0 0.0
  %653 = vmatpush1.msra.mxu0 0.0
  %654 = vmatprep.subr.mxu0 0.0
  %655 = vmatpush1.msra.mxu0 0.0
  %656 = vmatprep.subr.mxu0 0.0
  %657 = vmatpush1.msra.mxu0 0.0
  %658 = vmatprep.subr.mxu0 0.0
  %659 = vmatpush1.msra.mxu0 0.0
  %660 = vmatprep.subr.mxu0 0.0
  %661 = vmatpush1.msra.mxu0 0.0
  %662 = vmatprep.subr.mxu0 0.0
  %663 = vmatpush1.msra.mxu0 0.0
  %664 = vmatprep.subr.mxu0 0.0
  %665 = vmatpush1.msra.mxu0 0.0
  %666 = vmatprep.subr.mxu0 0.0
  %667 = vmatpush1.msra.mxu0 0.0
  %668 = vmatprep.subr.mxu0 0.0
  %669 = vmatpush1.msra.mxu0 0.0
  %670 = vmatprep.subr.mxu0 0.0
  %671 = vmatpush1.msra.mxu0 0.0
  %672 = vmatprep.subr.mxu0 0.0
  %673 = vmatpush1.msra.mxu0 0.0
  %674 = vmatprep.subr.mxu0 0.0
  %675 = vmatpush1.msra.mxu0 0.0
  %676 = vmatprep.subr.mxu0 0.0
  %677 = vmatpush1.msra.mxu0 %v192
  %678 = vmatprep.subr.mxu0 0.0
  %679 = vmatpush1.msra.mxu0 %v191
  %680 = vmatprep.subr.mxu0 0.0
  %681 = vmatpush1.msra.mxu0 %v190
  %682 = vmatprep.subr.mxu0 0.0
  %683 = vmatpush1.msra.mxu0 %v189
  %684 = vmatprep.subr.mxu0 0.0
  %685 = vmatpush2.msra.mxu0 0.0
  %686 = vmatprep.subr.mxu0 0.0
  %687 = vmatpush2.msra.mxu0 0.0
  %688 = vmatprep.subr.mxu0 0.0
  %689 = vmatpush2.msra.mxu0 0.0
  %690 = vmatprep.subr.mxu0 0.0
  %691 = vmatpush2.msra.mxu0 0.0
  %692 = vmatprep.subr.mxu0 0.0
  %693 = vmatpush2.msra.mxu0 0.0
  %694 = vmatprep.subr.mxu0 0.0
  %695 = vmatpush2.msra.mxu0 0.0
  %696 = vmatprep.subr.mxu0 0.0
  %697 = vmatpush2.msra.mxu0 0.0
  %698 = vmatprep.subr.mxu0 0.0
  %699 = vmatpush2.msra.mxu0 0.0
  %700 = vmatprep.subr.mxu0 0.0
  %701 = vmatpush2.msra.mxu0 0.0
  %702 = vmatprep.subr.mxu0 0.0
  %703 = vmatpush2.msra.mxu0 0.0
  %704 = vmatprep.subr.mxu0 0.0
  %705 = vmatpush2.msra.mxu0 0.0
  %706 = vmatprep.subr.mxu0 0.0
  %707 = vmatpush2.msra.mxu0 0.0
  %708 = vmatprep.subr.mxu0 0.0
  %709 = vmatpush2.msra.mxu0 0.0
  %710 = vmatprep.subr.mxu0 0.0
  %711 = vmatpush2.msra.mxu0 0.0
  %712 = vmatprep.subr.mxu0 0.0
  %713 = vmatpush2.msra.mxu0 0.0
  %714 = vmatprep.subr.mxu0 0.0
  %715 = vmatpush2.msra.mxu0 0.0
  %716 = vmatprep.mubr.f32.mxu0 0.0
  %717 = vmatmul.mubr.f32.gmra.mxu0 %v576
  %v718 = vpop.f32.mrf.mxu0
  %v719 = vadd.f32 0.0, %v718
  %v720 = vpop.f32.mrf.mxu0
  %721 = vdwg.mxu0
  %v722 = vadd.f32 %v651, %v719
  %v723 = vtanh.pop %v722
  %v725 = vsel %vm179, %v649, 0
  %727 = vmatprep.subr.mxu0 0.0
  %728 = vmatpush1.msra.mxu0 0.0
  %729 = vmatprep.subr.mxu0 0.0
  %730 = vmatpush1.msra.mxu0 0.0
  %731 = vmatprep.subr.mxu0 0.0
  %732 = vmatpush1.msra.mxu0 0.0
  %733 = vmatprep.subr.mxu0 0.0
  %734 = vmatpush1.msra.mxu0 0.0
  %735 = vmatprep.subr.mxu0 0.0
  %736 = vmatpush1.msra.mxu0 0.0
  %737 = vmatprep.subr.mxu0 0.0
  %738 = vmatpush1.msra.mxu0 0.0
  %739 = vmatprep.subr.mxu0 0.0
  %740 = vmatpush1.msra.mxu0 0.0
  %741 = vmatprep.subr.mxu0 0.0
  %742 = vmatpush1.msra.mxu0 0.0
  %743 = vmatprep.subr.mxu0 0.0
  %744 = vmatpush1.msra.mxu0 0.0
  %745 = vmatprep.subr.mxu0 0.0
  %746 = vmatpush1.msra.mxu0 0.0
  %747 = vmatprep.subr.mxu0 0.0
  %748 = vmatpush1.msra.mxu0 0.0
  %749 = vmatprep.subr.mxu0 0.0
  %750 = vmatpush1.msra.mxu0 0.0
  %751 = vmatprep.subr.mxu0 0.0
  %752 = vmatpush1.msra.mxu0 %v275
  %753 = vmatprep.subr.mxu0 0.0
  %754 = vmatpush1.msra.mxu0 %v274
  %755 = vmatprep.subr.mxu0 0.0
  %756 = vmatpush1.msra.mxu0 %v273
  %757 = vmatprep.subr.mxu0 0.0
  %758 = vmatpush1.msra.mxu0 %v272
  %759 = vmatprep.subr.mxu0 0.0
  %760 = vmatpush2.msra.mxu0 0.0
  %761 = vmatprep.subr.mxu0 0.0
  %762 = vmatpush2.msra.mxu0 0.0
  %763 = vmatprep.subr.mxu0 0.0
  %764 = vmatpush2.msra.mxu0 0.0
  %765 = vmatprep.subr.mxu0 0.0
  %766 = vmatpush2.msra.mxu0 0.0
  %767 = vmatprep.subr.mxu0 0.0
  %768 = vmatpush2.msra.mxu0 0.0
  %769 = vmatprep.subr.mxu0 0.0
  %770 = vmatpush2.msra.mxu0 0.0
  %771 = vmatprep.subr.mxu0 0.0
  %772 = vmatpush2.msra.mxu0 0.0
  %773 = vmatprep.subr.mxu0 0.0
  %774 = vmatpush2.msra.mxu0 0.0
  %775 = vmatprep.subr.mxu0 0.0
  %776 = vmatpush2.msra.mxu0 0.0
  %777 = vmatprep.subr.mxu0 0.0
  %778 = vmatpush2.msra.mxu0 0.0
  %779 = vmatprep.subr.mxu0 0.0
  %780 = vmatpush2.msra.mxu0 0.0
  %781 = vmatprep.subr.mxu0 0.0
  %782 = vmatpush2.msra.mxu0 0.0
  %783 = vmatprep.subr.mxu0 0.0
  %784 = vmatpush2.msra.mxu0 0.0
  %785 = vmatprep.subr.mxu0 0.0
  %786 = vmatpush2.msra.mxu0 0.0
  %787 = vmatprep.subr.mxu0 0.0
  %788 = vmatpush2.msra.mxu0 0.0
  %789 = vmatprep.subr.mxu0 0.0
  %790 = vmatpush2.msra.mxu0 0.0
  %791 = vmatprep.mubr.f32.mxu0 0.0
  %792 = vmatmul.mubr.f32.gmra.mxu0 %v725
  %v793 = vpop.f32.mrf.mxu0
  %v794 = vadd.f32 0.0, %v793
  %v795 = vpop.f32.mrf.mxu0
  %796 = vdwg.mxu0
  %v798 = vsel %vm179, %v723, 0
  %800 = vmatprep.subr.mxu0 0.0
  %801 = vmatpush1.msra.mxu0 0.0
  %802 = vmatprep.subr.mxu0 0.0
  %803 = vmatpush1.msra.mxu0 0.0
  %804 = vmatprep.subr.mxu0 0.0
  %805 = vmatpush1.msra.mxu0 0.0
  %806 = vmatprep.subr.mxu0 0.0
  %807 = vmatpush1.msra.mxu0 0.0
  %808 = vmatprep.subr.mxu0 0.0
  %809 = vmatpush1.msra.mxu0 0.0
  %810 = vmatprep.subr.mxu0 0.0
  %811 = vmatpush1.msra.mxu0 0.0
  %812 = vmatprep.subr.mxu0 0.0
  %813 = vmatpush1.msra.mxu0 0.0
  %814 = vmatprep.subr.mxu0 0.0
  %815 = vmatpush1.msra.mxu0 0.0
  %816 = vmatprep.subr.mxu0 0.0
  %817 = vmatpush1.msra.mxu0 0.0
  %818 = vmatprep.subr.mxu0 0.0
  %819 = vmatpush1.msra.mxu0 0.0
  %820 = vmatprep.subr.mxu0 0.0
  %821 = vmatpush1.msra.mxu0 0.0
  %822 = vmatprep.subr.mxu0 0.0
  %823 = vmatpush1.msra.mxu0 0.0
  %824 = vmatprep.subr.mxu0 0.0
  %825 = vmatpush1.msra.mxu0 %v271
  %826 = vmatprep.subr.mxu0 0.0
  %827 = vmatpush1.msra.mxu0 %v270
  %828 = vmatprep.subr.mxu0 0.0
  %829 = vmatpush1.msra.mxu0 %v269
  %830 = vmatprep.subr.mxu0 0.0
  %831 = vmatpush1.msra.mxu0 %v268
  %832 = vmatprep.subr.mxu0 0.0
  %833 = vmatpush2.msra.mxu0 0.0
  %834 = vmatprep.subr.mxu0 0.0
  %835 = vmatpush2.msra.mxu0 0.0
  %836 = vmatprep.subr.mxu0 0.0
  %837 = vmatpush2.msra.mxu0 0.0
  %838 = vmatprep.subr.mxu0 0.0
  %839 = vmatpush2.msra.mxu0 0.0
  %840 = vmatprep.subr.mxu0 0.0
  %841 = vmatpush2.msra.mxu0 0.0
  %842 = vmatprep.subr.mxu0 0.0
  %843 = vmatpush2.msra.mxu0 0.0
  %844 = vmatprep.subr.mxu0 0.0
  %845 = vmatpush2.msra.mxu0 0.0
  %846 = vmatprep.subr.mxu0 0.0
  %847 = vmatpush2.msra.mxu0 0.0
  %848 = vmatprep.subr.mxu0 0.0
  %849 = vmatpush2.msra.mxu0 0.0
  %850 = vmatprep.subr.mxu0 0.0
  %851 = vmatpush2.msra.mxu0 0.0
  %852 = vmatprep.subr.mxu0 0.0
  %853 = vmatpush2.msra.mxu0 0.0
  %854 = vmatprep.subr.mxu0 0.0
  %855 = vmatpush2.msra.mxu0 0.0
  %856 = vmatprep.subr.mxu0 0.0
  %857 = vmatpush2.msra.mxu0 0.0
  %858 = vmatprep.subr.mxu0 0.0
  %859 = vmatpush2.msra.mxu0 0.0
  %860 = vmatprep.subr.mxu0 0.0
  %861 = vmatpush2.msra.mxu0 0.0
  %862 = vmatprep.subr.mxu0 0.0
  %863 = vmatpush2.msra.mxu0 0.0
  %864 = vmatprep.mubr.f32.mxu0 0.0
  %865 = vmatmul.mubr.f32.gmra.mxu0 %v798
  %v866 = vpop.f32.mrf.mxu0
  %v867 = vadd.f32 %v794, %v866
  %v868 = vpop.f32.mrf.mxu0
  %869 = vdwg.mxu0
  %v870 = vadd.f32 %v867, %v424
  %v871 = vtanh.pop %v870
  %s872 = scalar_lea.vmem [#allocation2], 24
  %v873 = vld [vmem:[%s872] sm:$0xff]
  %874 = vmatprep.subr.mxu0 0.0
  %875 = vmatpush1.msra.mxu0 0.0
  %876 = vmatprep.subr.mxu0 0.0
  %877 = vmatpush1.msra.mxu0 0.0
  %878 = vmatprep.subr.mxu0 0.0
  %879 = vmatpush1.msra.mxu0 0.0
  %880 = vmatprep.subr.mxu0 0.0
  %881 = vmatpush1.msra.mxu0 0.0
  %882 = vmatprep.subr.mxu0 0.0
  %883 = vmatpush1.msra.mxu0 0.0
  %884 = vmatprep.subr.mxu0 0.0
  %885 = vmatpush1.msra.mxu0 0.0
  %886 = vmatprep.subr.mxu0 0.0
  %887 = vmatpush1.msra.mxu0 0.0
  %888 = vmatprep.subr.mxu0 0.0
  %889 = vmatpush1.msra.mxu0 0.0
  %890 = vmatprep.subr.mxu0 0.0
  %891 = vmatpush1.msra.mxu0 0.0
  %892 = vmatprep.subr.mxu0 0.0
  %893 = vmatpush1.msra.mxu0 0.0
  %894 = vmatprep.subr.mxu0 0.0
  %895 = vmatpush1.msra.mxu0 0.0
  %896 = vmatprep.subr.mxu0 0.0
  %897 = vmatpush1.msra.mxu0 0.0
  %898 = vmatprep.subr.mxu0 0.0
  %899 = vmatpush1.msra.mxu0 %v192
  %900 = vmatprep.subr.mxu0 0.0
  %901 = vmatpush1.msra.mxu0 %v191
  %902 = vmatprep.subr.mxu0 0.0
  %903 = vmatpush1.msra.mxu0 %v190
  %904 = vmatprep.subr.mxu0 0.0
  %905 = vmatpush1.msra.mxu0 %v189
  %906 = vmatprep.subr.mxu0 0.0
  %907 = vmatpush2.msra.mxu0 0.0
  %908 = vmatprep.subr.mxu0 0.0
  %909 = vmatpush2.msra.mxu0 0.0
  %910 = vmatprep.subr.mxu0 0.0
  %911 = vmatpush2.msra.mxu0 0.0
  %912 = vmatprep.subr.mxu0 0.0
  %913 = vmatpush2.msra.mxu0 0.0
  %914 = vmatprep.subr.mxu0 0.0
  %915 = vmatpush2.msra.mxu0 0.0
  %916 = vmatprep.subr.mxu0 0.0
  %917 = vmatpush2.msra.mxu0 0.0
  %918 = vmatprep.subr.mxu0 0.0
  %919 = vmatpush2.msra.mxu0 0.0
  %920 = vmatprep.subr.mxu0 0.0
  %921 = vmatpush2.msra.mxu0 0.0
  %922 = vmatprep.subr.mxu0 0.0
  %923 = vmatpush2.msra.mxu0 0.0
  %924 = vmatprep.subr.mxu0 0.0
  %925 = vmatpush2.msra.mxu0 0.0
  %926 = vmatprep.subr.mxu0 0.0
  %927 = vmatpush2.msra.mxu0 0.0
  %928 = vmatprep.subr.mxu0 0.0
  %929 = vmatpush2.msra.mxu0 0.0
  %930 = vmatprep.subr.mxu0 0.0
  %931 = vmatpush2.msra.mxu0 0.0
  %932 = vmatprep.subr.mxu0 0.0
  %933 = vmatpush2.msra.mxu0 0.0
  %934 = vmatprep.subr.mxu0 0.0
  %935 = vmatpush2.msra.mxu0 0.0
  %936 = vmatprep.subr.mxu0 0.0
  %937 = vmatpush2.msra.mxu0 0.0
  %938 = vmatprep.mubr.f32.mxu0 0.0
  %939 = vmatmul.mubr.f32.gmra.mxu0 %v798
  %v940 = vpop.f32.mrf.mxu0
  %v941 = vadd.f32 0.0, %v940
  %v942 = vpop.f32.mrf.mxu0
  %943 = vdwg.mxu0
  %v944 = vadd.f32 %v873, %v941
  %v945 = vtanh.pop %v944
  %v947 = vsel %vm179, %v871, 0
  %949 = vmatprep.subr.mxu0 0.0
  %950 = vmatpush1.msra.mxu0 0.0
  %951 = vmatprep.subr.mxu0 0.0
  %952 = vmatpush1.msra.mxu0 0.0
  %953 = vmatprep.subr.mxu0 0.0
  %954 = vmatpush1.msra.mxu0 0.0
  %955 = vmatprep.subr.mxu0 0.0
  %956 = vmatpush1.msra.mxu0 0.0
  %957 = vmatprep.subr.mxu0 0.0
  %958 = vmatpush1.msra.mxu0 0.0
  %959 = vmatprep.subr.mxu0 0.0
  %960 = vmatpush1.msra.mxu0 0.0
  %961 = vmatprep.subr.mxu0 0.0
  %962 = vmatpush1.msra.mxu0 0.0
  %963 = vmatprep.subr.mxu0 0.0
  %964 = vmatpush1.msra.mxu0 0.0
  %965 = vmatprep.subr.mxu0 0.0
  %966 = vmatpush1.msra.mxu0 0.0
  %967 = vmatprep.subr.mxu0 0.0
  %968 = vmatpush1.msra.mxu0 0.0
  %969 = vmatprep.subr.mxu0 0.0
  %970 = vmatpush1.msra.mxu0 0.0
  %971 = vmatprep.subr.mxu0 0.0
  %972 = vmatpush1.msra.mxu0 0.0
  %973 = vmatprep.subr.mxu0 0.0
  %974 = vmatpush1.msra.mxu0 %v275
  %975 = vmatprep.subr.mxu0 0.0
  %976 = vmatpush1.msra.mxu0 %v274
  %977 = vmatprep.subr.mxu0 0.0
  %978 = vmatpush1.msra.mxu0 %v273
  %979 = vmatprep.subr.mxu0 0.0
  %980 = vmatpush1.msra.mxu0 %v272
  %981 = vmatprep.subr.mxu0 0.0
  %982 = vmatpush2.msra.mxu0 0.0
  %983 = vmatprep.subr.mxu0 0.0
  %984 = vmatpush2.msra.mxu0 0.0
  %985 = vmatprep.subr.mxu0 0.0
  %986 = vmatpush2.msra.mxu0 0.0
  %987 = vmatprep.subr.mxu0 0.0
  %988 = vmatpush2.msra.mxu0 0.0
  %989 = vmatprep.subr.mxu0 0.0
  %990 = vmatpush2.msra.mxu0 0.0
  %991 = vmatprep.subr.mxu0 0.0
  %992 = vmatpush2.msra.mxu0 0.0
  %993 = vmatprep.subr.mxu0 0.0
  %994 = vmatpush2.msra.mxu0 0.0
  %995 = vmatprep.subr.mxu0 0.0
  %996 = vmatpush2.msra.mxu0 0.0
  %997 = vmatprep.subr.mxu0 0.0
  %998 = vmatpush2.msra.mxu0 0.0
  %999 = vmatprep.subr.mxu0 0.0
  %1000 = vmatpush2.msra.mxu0 0.0
  %1001 = vmatprep.subr.mxu0 0.0
  %1002 = vmatpush2.msra.mxu0 0.0
  %1003 = vmatprep.subr.mxu0 0.0
  %1004 = vmatpush2.msra.mxu0 0.0
  %1005 = vmatprep.subr.mxu0 0.0
  %1006 = vmatpush2.msra.mxu0 0.0
  %1007 = vmatprep.subr.mxu0 0.0
  %1008 = vmatpush2.msra.mxu0 0.0
  %1009 = vmatprep.subr.mxu0 0.0
  %1010 = vmatpush2.msra.mxu0 0.0
  %1011 = vmatprep.subr.mxu0 0.0
  %1012 = vmatpush2.msra.mxu0 0.0
  %1013 = vmatprep.mubr.f32.mxu0 0.0
  %1014 = vmatmul.mubr.f32.gmra.mxu0 %v947
  %v1015 = vpop.f32.mrf.mxu0
  %v1016 = vadd.f32 0.0, %v1015
  %v1017 = vpop.f32.mrf.mxu0
  %1018 = vdwg.mxu0
  %v1020 = vsel %vm179, %v945, 0
  %1022 = vmatprep.subr.mxu0 0.0
  %1023 = vmatpush1.msra.mxu0 0.0
  %1024 = vmatprep.subr.mxu0 0.0
  %1025 = vmatpush1.msra.mxu0 0.0
  %1026 = vmatprep.subr.mxu0 0.0
  %1027 = vmatpush1.msra.mxu0 0.0
  %1028 = vmatprep.subr.mxu0 0.0
  %1029 = vmatpush1.msra.mxu0 0.0
  %1030 = vmatprep.subr.mxu0 0.0
  %1031 = vmatpush1.msra.mxu0 0.0
  %1032 = vmatprep.subr.mxu0 0.0
  %1033 = vmatpush1.msra.mxu0 0.0
  %1034 = vmatprep.subr.mxu0 0.0
  %1035 = vmatpush1.msra.mxu0 0.0
  %1036 = vmatprep.subr.mxu0 0.0
  %1037 = vmatpush1.msra.mxu0 0.0
  %1038 = vmatprep.subr.mxu0 0.0
  %1039 = vmatpush1.msra.mxu0 0.0
  %1040 = vmatprep.subr.mxu0 0.0
  %1041 = vmatpush1.msra.mxu0 0.0
  %1042 = vmatprep.subr.mxu0 0.0
  %1043 = vmatpush1.msra.mxu0 0.0
  %1044 = vmatprep.subr.mxu0 0.0
  %1045 = vmatpush1.msra.mxu0 0.0
  %1046 = vmatprep.subr.mxu0 0.0
  %1047 = vmatpush1.msra.mxu0 %v271
  %1048 = vmatprep.subr.mxu0 0.0
  %1049 = vmatpush1.msra.mxu0 %v270
  %1050 = vmatprep.subr.mxu0 0.0
  %1051 = vmatpush1.msra.mxu0 %v269
  %1052 = vmatprep.subr.mxu0 0.0
  %1053 = vmatpush1.msra.mxu0 %v268
  %1054 = vmatprep.subr.mxu0 0.0
  %1055 = vmatpush2.msra.mxu0 0.0
  %1056 = vmatprep.subr.mxu0 0.0
  %1057 = vmatpush2.msra.mxu0 0.0
  %1058 = vmatprep.subr.mxu0 0.0
  %1059 = vmatpush2.msra.mxu0 0.0
  %1060 = vmatprep.subr.mxu0 0.0
  %1061 = vmatpush2.msra.mxu0 0.0
  %1062 = vmatprep.subr.mxu0 0.0
  %1063 = vmatpush2.msra.mxu0 0.0
  %1064 = vmatprep.subr.mxu0 0.0
  %1065 = vmatpush2.msra.mxu0 0.0
  %1066 = vmatprep.subr.mxu0 0.0
  %1067 = vmatpush2.msra.mxu0 0.0
  %1068 = vmatprep.subr.mxu0 0.0
  %1069 = vmatpush2.msra.mxu0 0.0
  %1070 = vmatprep.subr.mxu0 0.0
  %1071 = vmatpush2.msra.mxu0 0.0
  %1072 = vmatprep.subr.mxu0 0.0
  %1073 = vmatpush2.msra.mxu0 0.0
  %1074 = vmatprep.subr.mxu0 0.0
  %1075 = vmatpush2.msra.mxu0 0.0
  %1076 = vmatprep.subr.mxu0 0.0
  %1077 = vmatpush2.msra.mxu0 0.0
  %1078 = vmatprep.subr.mxu0 0.0
  %1079 = vmatpush2.msra.mxu0 0.0
  %1080 = vmatprep.subr.mxu0 0.0
  %1081 = vmatpush2.msra.mxu0 0.0
  %1082 = vmatprep.subr.mxu0 0.0
  %1083 = vmatpush2.msra.mxu0 0.0
  %1084 = vmatprep.subr.mxu0 0.0
  %1085 = vmatpush2.msra.mxu0 0.0
  %1086 = vmatprep.mubr.f32.mxu0 0.0
  %1087 = vmatmul.mubr.f32.gmra.mxu0 %v1020
  %v1088 = vpop.f32.mrf.mxu0
  %v1089 = vadd.f32 %v1016, %v1088
  %v1090 = vpop.f32.mrf.mxu0
  %1091 = vdwg.mxu0
  %v1092 = vadd.f32 %v1089, %v424
  %v1093 = vtanh.pop %v1092
  %s1094 = scalar_lea.vmem [#allocation2], 32
  %v1095 = vld [vmem:[%s1094] sm:$0xff]
  %1096 = vmatprep.subr.mxu0 0.0
  %1097 = vmatpush1.msra.mxu0 0.0
  %1098 = vmatprep.subr.mxu0 0.0
  %1099 = vmatpush1.msra.mxu0 0.0
  %1100 = vmatprep.subr.mxu0 0.0
  %1101 = vmatpush1.msra.mxu0 0.0
  %1102 = vmatprep.subr.mxu0 0.0
  %1103 = vmatpush1.msra.mxu0 0.0
  %1104 = vmatprep.subr.mxu0 0.0
  %1105 = vmatpush1.msra.mxu0 0.0
  %1106 = vmatprep.subr.mxu0 0.0
  %1107 = vmatpush1.msra.mxu0 0.0
  %1108 = vmatprep.subr.mxu0 0.0
  %1109 = vmatpush1.msra.mxu0 0.0
  %1110 = vmatprep.subr.mxu0 0.0
  %1111 = vmatpush1.msra.mxu0 0.0
  %1112 = vmatprep.subr.mxu0 0.0
  %1113 = vmatpush1.msra.mxu0 0.0
  %1114 = vmatprep.subr.mxu0 0.0
  %1115 = vmatpush1.msra.mxu0 0.0
  %1116 = vmatprep.subr.mxu0 0.0
  %1117 = vmatpush1.msra.mxu0 0.0
  %1118 = vmatprep.subr.mxu0 0.0
  %1119 = vmatpush1.msra.mxu0 0.0
  %1120 = vmatprep.subr.mxu0 0.0
  %1121 = vmatpush1.msra.mxu0 %v192
  %1122 = vmatprep.subr.mxu0 0.0
  %1123 = vmatpush1.msra.mxu0 %v191
  %1124 = vmatprep.subr.mxu0 0.0
  %1125 = vmatpush1.msra.mxu0 %v190
  %1126 = vmatprep.subr.mxu0 0.0
  %1127 = vmatpush1.msra.mxu0 %v189
  %1128 = vmatprep.subr.mxu0 0.0
  %1129 = vmatpush2.msra.mxu0 0.0
  %1130 = vmatprep.subr.mxu0 0.0
  %1131 = vmatpush2.msra.mxu0 0.0
  %1132 = vmatprep.subr.mxu0 0.0
  %1133 = vmatpush2.msra.mxu0 0.0
  %1134 = vmatprep.subr.mxu0 0.0
  %1135 = vmatpush2.msra.mxu0 0.0
  %1136 = vmatprep.subr.mxu0 0.0
  %1137 = vmatpush2.msra.mxu0 0.0
  %1138 = vmatprep.subr.mxu0 0.0
  %1139 = vmatpush2.msra.mxu0 0.0
  %1140 = vmatprep.subr.mxu0 0.0
  %1141 = vmatpush2.msra.mxu0 0.0
  %1142 = vmatprep.subr.mxu0 0.0
  %1143 = vmatpush2.msra.mxu0 0.0
  %1144 = vmatprep.subr.mxu0 0.0
  %1145 = vmatpush2.msra.mxu0 0.0
  %1146 = vmatprep.subr.mxu0 0.0
  %1147 = vmatpush2.msra.mxu0 0.0
  %1148 = vmatprep.subr.mxu0 0.0
  %1149 = vmatpush2.msra.mxu0 0.0
  %1150 = vmatprep.subr.mxu0 0.0
  %1151 = vmatpush2.msra.mxu0 0.0
  %1152 = vmatprep.subr.mxu0 0.0
  %1153 = vmatpush2.msra.mxu0 0.0
  %1154 = vmatprep.subr.mxu0 0.0
  %1155 = vmatpush2.msra.mxu0 0.0
  %1156 = vmatprep.subr.mxu0 0.0
  %1157 = vmatpush2.msra.mxu0 0.0
  %1158 = vmatprep.subr.mxu0 0.0
  %1159 = vmatpush2.msra.mxu0 0.0
  %1160 = vmatprep.mubr.f32.mxu0 0.0
  %1161 = vmatmul.mubr.f32.gmra.mxu0 %v1020
  %v1162 = vpop.f32.mrf.mxu0
  %v1163 = vadd.f32 0.0, %v1162
  %v1164 = vpop.f32.mrf.mxu0
  %1165 = vdwg.mxu0
  %v1166 = vadd.f32 %v1095, %v1163
  %v1167 = vtanh.pop %v1166
  %v1169 = vsel %vm179, %v1093, 0
  %1171 = vmatprep.subr.mxu0 0.0
  %1172 = vmatpush1.msra.mxu0 0.0
  %1173 = vmatprep.subr.mxu0 0.0
  %1174 = vmatpush1.msra.mxu0 0.0
  %1175 = vmatprep.subr.mxu0 0.0
  %1176 = vmatpush1.msra.mxu0 0.0
  %1177 = vmatprep.subr.mxu0 0.0
  %1178 = vmatpush1.msra.mxu0 0.0
  %1179 = vmatprep.subr.mxu0 0.0
  %1180 = vmatpush1.msra.mxu0 0.0
  %1181 = vmatprep.subr.mxu0 0.0
  %1182 = vmatpush1.msra.mxu0 0.0
  %1183 = vmatprep.subr.mxu0 0.0
  %1184 = vmatpush1.msra.mxu0 0.0
  %1185 = vmatprep.subr.mxu0 0.0
  %1186 = vmatpush1.msra.mxu0 0.0
  %1187 = vmatprep.subr.mxu0 0.0
  %1188 = vmatpush1.msra.mxu0 0.0
  %1189 = vmatprep.subr.mxu0 0.0
  %1190 = vmatpush1.msra.mxu0 0.0
  %1191 = vmatprep.subr.mxu0 0.0
  %1192 = vmatpush1.msra.mxu0 0.0
  %1193 = vmatprep.subr.mxu0 0.0
  %1194 = vmatpush1.msra.mxu0 0.0
  %1195 = vmatprep.subr.mxu0 0.0
  %1196 = vmatpush1.msra.mxu0 %v275
  %1197 = vmatprep.subr.mxu0 0.0
  %1198 = vmatpush1.msra.mxu0 %v274
  %1199 = vmatprep.subr.mxu0 0.0
  %1200 = vmatpush1.msra.mxu0 %v273
  %1201 = vmatprep.subr.mxu0 0.0
  %1202 = vmatpush1.msra.mxu0 %v272
  %1203 = vmatprep.subr.mxu0 0.0
  %1204 = vmatpush2.msra.mxu0 0.0
  %1205 = vmatprep.subr.mxu0 0.0
  %1206 = vmatpush2.msra.mxu0 0.0
  %1207 = vmatprep.subr.mxu0 0.0
  %1208 = vmatpush2.msra.mxu0 0.0
  %1209 = vmatprep.subr.mxu0 0.0
  %1210 = vmatpush2.msra.mxu0 0.0
  %1211 = vmatprep.subr.mxu0 0.0
  %1212 = vmatpush2.msra.mxu0 0.0
  %1213 = vmatprep.subr.mxu0 0.0
  %1214 = vmatpush2.msra.mxu0 0.0
  %1215 = vmatprep.subr.mxu0 0.0
  %1216 = vmatpush2.msra.mxu0 0.0
  %1217 = vmatprep.subr.mxu0 0.0
  %1218 = vmatpush2.msra.mxu0 0.0
  %1219 = vmatprep.subr.mxu0 0.0
  %1220 = vmatpush2.msra.mxu0 0.0
  %1221 = vmatprep.subr.mxu0 0.0
  %1222 = vmatpush2.msra.mxu0 0.0
  %1223 = vmatprep.subr.mxu0 0.0
  %1224 = vmatpush2.msra.mxu0 0.0
  %1225 = vmatprep.subr.mxu0 0.0
  %1226 = vmatpush2.msra.mxu0 0.0
  %1227 = vmatprep.subr.mxu0 0.0
  %1228 = vmatpush2.msra.mxu0 0.0
  %1229 = vmatprep.subr.mxu0 0.0
  %1230 = vmatpush2.msra.mxu0 0.0
  %1231 = vmatprep.subr.mxu0 0.0
  %1232 = vmatpush2.msra.mxu0 0.0
  %1233 = vmatprep.subr.mxu0 0.0
  %1234 = vmatpush2.msra.mxu0 0.0
  %1235 = vmatprep.mubr.f32.mxu0 0.0
  %1236 = vmatmul.mubr.f32.gmra.mxu0 %v1169
  %v1237 = vpop.f32.mrf.mxu0
  %v1238 = vadd.f32 0.0, %v1237
  %v1239 = vpop.f32.mrf.mxu0
  %1240 = vdwg.mxu0
  %v1242 = vsel %vm179, %v1167, 0
  %1244 = vmatprep.subr.mxu0 0.0
  %1245 = vmatpush1.msra.mxu0 0.0
  %1246 = vmatprep.subr.mxu0 0.0
  %1247 = vmatpush1.msra.mxu0 0.0
  %1248 = vmatprep.subr.mxu0 0.0
  %1249 = vmatpush1.msra.mxu0 0.0
  %1250 = vmatprep.subr.mxu0 0.0
  %1251 = vmatpush1.msra.mxu0 0.0
  %1252 = vmatprep.subr.mxu0 0.0
  %1253 = vmatpush1.msra.mxu0 0.0
  %1254 = vmatprep.subr.mxu0 0.0
  %1255 = vmatpush1.msra.mxu0 0.0
  %1256 = vmatprep.subr.mxu0 0.0
  %1257 = vmatpush1.msra.mxu0 0.0
  %1258 = vmatprep.subr.mxu0 0.0
  %1259 = vmatpush1.msra.mxu0 0.0
  %1260 = vmatprep.subr.mxu0 0.0
  %1261 = vmatpush1.msra.mxu0 0.0
  %1262 = vmatprep.subr.mxu0 0.0
  %1263 = vmatpush1.msra.mxu0 0.0
  %1264 = vmatprep.subr.mxu0 0.0
  %1265 = vmatpush1.msra.mxu0 0.0
  %1266 = vmatprep.subr.mxu0 0.0
  %1267 = vmatpush1.msra.mxu0 0.0
  %1268 = vmatprep.subr.mxu0 0.0
  %1269 = vmatpush1.msra.mxu0 %v271
  %1270 = vmatprep.subr.mxu0 0.0
  %1271 = vmatpush1.msra.mxu0 %v270
  %1272 = vmatprep.subr.mxu0 0.0
  %1273 = vmatpush1.msra.mxu0 %v269
  %1274 = vmatprep.subr.mxu0 0.0
  %1275 = vmatpush1.msra.mxu0 %v268
  %1276 = vmatprep.subr.mxu0 0.0
  %1277 = vmatpush2.msra.mxu0 0.0
  %1278 = vmatprep.subr.mxu0 0.0
  %1279 = vmatpush2.msra.mxu0 0.0
  %1280 = vmatprep.subr.mxu0 0.0
  %1281 = vmatpush2.msra.mxu0 0.0
  %1282 = vmatprep.subr.mxu0 0.0
  %1283 = vmatpush2.msra.mxu0 0.0
  %1284 = vmatprep.subr.mxu0 0.0
  %1285 = vmatpush2.msra.mxu0 0.0
  %1286 = vmatprep.subr.mxu0 0.0
  %1287 = vmatpush2.msra.mxu0 0.0
  %1288 = vmatprep.subr.mxu0 0.0
  %1289 = vmatpush2.msra.mxu0 0.0
  %1290 = vmatprep.subr.mxu0 0.0
  %1291 = vmatpush2.msra.mxu0 0.0
  %1292 = vmatprep.subr.mxu0 0.0
  %1293 = vmatpush2.msra.mxu0 0.0
  %1294 = vmatprep.subr.mxu0 0.0
  %1295 = vmatpush2.msra.mxu0 0.0
  %1296 = vmatprep.subr.mxu0 0.0
  %1297 = vmatpush2.msra.mxu0 0.0
  %1298 = vmatprep.subr.mxu0 0.0
  %1299 = vmatpush2.msra.mxu0 0.0
  %1300 = vmatprep.subr.mxu0 0.0
  %1301 = vmatpush2.msra.mxu0 0.0
  %1302 = vmatprep.subr.mxu0 0.0
  %1303 = vmatpush2.msra.mxu0 0.0
  %1304 = vmatprep.subr.mxu0 0.0
  %1305 = vmatpush2.msra.mxu0 0.0
  %1306 = vmatprep.subr.mxu0 0.0
  %1307 = vmatpush2.msra.mxu0 0.0
  %1308 = vmatprep.mubr.f32.mxu0 0.0
  %1309 = vmatmul.mubr.f32.gmra.mxu0 %v1242
  %v1310 = vpop.f32.mrf.mxu0
  %v1311 = vadd.f32 %v1238, %v1310
  %v1312 = vpop.f32.mrf.mxu0
  %1313 = vdwg.mxu0
  %v1314 = vadd.f32 %v1311, %v424
  %v1315 = vtanh.pop %v1314
  %s1316 = scalar_lea.vmem [#allocation2], 40
  %v1317 = vld [vmem:[%s1316] sm:$0xff]
  %1318 = vmatprep.subr.mxu0 0.0
  %1319 = vmatpush1.msra.mxu0 0.0
  %1320 = vmatprep.subr.mxu0 0.0
  %1321 = vmatpush1.msra.mxu0 0.0
  %1322 = vmatprep.subr.mxu0 0.0
  %1323 = vmatpush1.msra.mxu0 0.0
  %1324 = vmatprep.subr.mxu0 0.0
  %1325 = vmatpush1.msra.mxu0 0.0
  %1326 = vmatprep.subr.mxu0 0.0
  %1327 = vmatpush1.msra.mxu0 0.0
  %1328 = vmatprep.subr.mxu0 0.0
  %1329 = vmatpush1.msra.mxu0 0.0
  %1330 = vmatprep.subr.mxu0 0.0
  %1331 = vmatpush1.msra.mxu0 0.0
  %1332 = vmatprep.subr.mxu0 0.0
  %1333 = vmatpush1.msra.mxu0 0.0
  %1334 = vmatprep.subr.mxu0 0.0
  %1335 = vmatpush1.msra.mxu0 0.0
  %1336 = vmatprep.subr.mxu0 0.0
  %1337 = vmatpush1.msra.mxu0 0.0
  %1338 = vmatprep.subr.mxu0 0.0
  %1339 = vmatpush1.msra.mxu0 0.0
  %1340 = vmatprep.subr.mxu0 0.0
  %1341 = vmatpush1.msra.mxu0 0.0
  %1342 = vmatprep.subr.mxu0 0.0
  %1343 = vmatpush1.msra.mxu0 %v192
  %1344 = vmatprep.subr.mxu0 0.0
  %1345 = vmatpush1.msra.mxu0 %v191
  %1346 = vmatprep.subr.mxu0 0.0
  %1347 = vmatpush1.msra.mxu0 %v190
  %1348 = vmatprep.subr.mxu0 0.0
  %1349 = vmatpush1.msra.mxu0 %v189
  %1350 = vmatprep.subr.mxu0 0.0
  %1351 = vmatpush2.msra.mxu0 0.0
  %1352 = vmatprep.subr.mxu0 0.0
  %1353 = vmatpush2.msra.mxu0 0.0
  %1354 = vmatprep.subr.mxu0 0.0
  %1355 = vmatpush2.msra.mxu0 0.0
  %1356 = vmatprep.subr.mxu0 0.0
  %1357 = vmatpush2.msra.mxu0 0.0
  %1358 = vmatprep.subr.mxu0 0.0
  %1359 = vmatpush2.msra.mxu0 0.0
  %1360 = vmatprep.subr.mxu0 0.0
  %1361 = vmatpush2.msra.mxu0 0.0
  %1362 = vmatprep.subr.mxu0 0.0
  %1363 = vmatpush2.msra.mxu0 0.0
  %1364 = vmatprep.subr.mxu0 0.0
  %1365 = vmatpush2.msra.mxu0 0.0
  %1366 = vmatprep.subr.mxu0 0.0
  %1367 = vmatpush2.msra.mxu0 0.0
  %1368 = vmatprep.subr.mxu0 0.0
  %1369 = vmatpush2.msra.mxu0 0.0
  %1370 = vmatprep.subr.mxu0 0.0
  %1371 = vmatpush2.msra.mxu0 0.0
  %1372 = vmatprep.subr.mxu0 0.0
  %1373 = vmatpush2.msra.mxu0 0.0
  %1374 = vmatprep.subr.mxu0 0.0
  %1375 = vmatpush2.msra.mxu0 0.0
  %1376 = vmatprep.subr.mxu0 0.0
  %1377 = vmatpush2.msra.mxu0 0.0
  %1378 = vmatprep.subr.mxu0 0.0
  %1379 = vmatpush2.msra.mxu0 0.0
  %1380 = vmatprep.subr.mxu0 0.0
  %1381 = vmatpush2.msra.mxu0 0.0
  %1382 = vmatprep.mubr.f32.mxu0 0.0
  %1383 = vmatmul.mubr.f32.gmra.mxu0 %v1242
  %v1384 = vpop.f32.mrf.mxu0
  %v1385 = vadd.f32 0.0, %v1384
  %v1386 = vpop.f32.mrf.mxu0
  %1387 = vdwg.mxu0
  %v1388 = vadd.f32 %v1317, %v1385
  %v1389 = vtanh.pop %v1388
  %v1391 = vsel %vm179, %v1315, 0
  %1393 = vmatprep.subr.mxu0 0.0
  %1394 = vmatpush1.msra.mxu0 0.0
  %1395 = vmatprep.subr.mxu0 0.0
  %1396 = vmatpush1.msra.mxu0 0.0
  %1397 = vmatprep.subr.mxu0 0.0
  %1398 = vmatpush1.msra.mxu0 0.0
  %1399 = vmatprep.subr.mxu0 0.0
  %1400 = vmatpush1.msra.mxu0 0.0
  %1401 = vmatprep.subr.mxu0 0.0
  %1402 = vmatpush1.msra.mxu0 0.0
  %1403 = vmatprep.subr.mxu0 0.0
  %1404 = vmatpush1.msra.mxu0 0.0
  %1405 = vmatprep.subr.mxu0 0.0
  %1406 = vmatpush1.msra.mxu0 0.0
  %1407 = vmatprep.subr.mxu0 0.0
  %1408 = vmatpush1.msra.mxu0 0.0
  %1409 = vmatprep.subr.mxu0 0.0
  %1410 = vmatpush1.msra.mxu0 0.0
  %1411 = vmatprep.subr.mxu0 0.0
  %1412 = vmatpush1.msra.mxu0 0.0
  %1413 = vmatprep.subr.mxu0 0.0
  %1414 = vmatpush1.msra.mxu0 0.0
  %1415 = vmatprep.subr.mxu0 0.0
  %1416 = vmatpush1.msra.mxu0 0.0
  %1417 = vmatprep.subr.mxu0 0.0
  %1418 = vmatpush1.msra.mxu0 %v275
  %1419 = vmatprep.subr.mxu0 0.0
  %1420 = vmatpush1.msra.mxu0 %v274
  %1421 = vmatprep.subr.mxu0 0.0
  %1422 = vmatpush1.msra.mxu0 %v273
  %1423 = vmatprep.subr.mxu0 0.0
  %1424 = vmatpush1.msra.mxu0 %v272
  %1425 = vmatprep.subr.mxu0 0.0
  %1426 = vmatpush2.msra.mxu0 0.0
  %1427 = vmatprep.subr.mxu0 0.0
  %1428 = vmatpush2.msra.mxu0 0.0
  %1429 = vmatprep.subr.mxu0 0.0
  %1430 = vmatpush2.msra.mxu0 0.0
  %1431 = vmatprep.subr.mxu0 0.0
  %1432 = vmatpush2.msra.mxu0 0.0
  %1433 = vmatprep.subr.mxu0 0.0
  %1434 = vmatpush2.msra.mxu0 0.0
  %1435 = vmatprep.subr.mxu0 0.0
  %1436 = vmatpush2.msra.mxu0 0.0
  %1437 = vmatprep.subr.mxu0 0.0
  %1438 = vmatpush2.msra.mxu0 0.0
  %1439 = vmatprep.subr.mxu0 0.0
  %1440 = vmatpush2.msra.mxu0 0.0
  %1441 = vmatprep.subr.mxu0 0.0
  %1442 = vmatpush2.msra.mxu0 0.0
  %1443 = vmatprep.subr.mxu0 0.0
  %1444 = vmatpush2.msra.mxu0 0.0
  %1445 = vmatprep.subr.mxu0 0.0
  %1446 = vmatpush2.msra.mxu0 0.0
  %1447 = vmatprep.subr.mxu0 0.0
  %1448 = vmatpush2.msra.mxu0 0.0
  %1449 = vmatprep.subr.mxu0 0.0
  %1450 = vmatpush2.msra.mxu0 0.0
  %1451 = vmatprep.subr.mxu0 0.0
  %1452 = vmatpush2.msra.mxu0 0.0
  %1453 = vmatprep.subr.mxu0 0.0
  %1454 = vmatpush2.msra.mxu0 0.0
  %1455 = vmatprep.subr.mxu0 0.0
  %1456 = vmatpush2.msra.mxu0 0.0
  %1457 = vmatprep.mubr.f32.mxu0 0.0
  %1458 = vmatmul.mubr.f32.gmra.mxu0 %v1391
  %v1459 = vpop.f32.mrf.mxu0
  %v1460 = vadd.f32 0.0, %v1459
  %v1461 = vpop.f32.mrf.mxu0
  %1462 = vdwg.mxu0
  %v1464 = vsel %vm179, %v1389, 0
  %1466 = vmatprep.subr.mxu0 0.0
  %1467 = vmatpush1.msra.mxu0 0.0
  %1468 = vmatprep.subr.mxu0 0.0
  %1469 = vmatpush1.msra.mxu0 0.0
  %1470 = vmatprep.subr.mxu0 0.0
  %1471 = vmatpush1.msra.mxu0 0.0
  %1472 = vmatprep.subr.mxu0 0.0
  %1473 = vmatpush1.msra.mxu0 0.0
  %1474 = vmatprep.subr.mxu0 0.0
  %1475 = vmatpush1.msra.mxu0 0.0
  %1476 = vmatprep.subr.mxu0 0.0
  %1477 = vmatpush1.msra.mxu0 0.0
  %1478 = vmatprep.subr.mxu0 0.0
  %1479 = vmatpush1.msra.mxu0 0.0
  %1480 = vmatprep.subr.mxu0 0.0
  %1481 = vmatpush1.msra.mxu0 0.0
  %1482 = vmatprep.subr.mxu0 0.0
  %1483 = vmatpush1.msra.mxu0 0.0
  %1484 = vmatprep.subr.mxu0 0.0
  %1485 = vmatpush1.msra.mxu0 0.0
  %1486 = vmatprep.subr.mxu0 0.0
  %1487 = vmatpush1.msra.mxu0 0.0
  %1488 = vmatprep.subr.mxu0 0.0
  %1489 = vmatpush1.msra.mxu0 0.0
  %1490 = vmatprep.subr.mxu0 0.0
  %1491 = vmatpush1.msra.mxu0 %v271
  %1492 = vmatprep.subr.mxu0 0.0
  %1493 = vmatpush1.msra.mxu0 %v270
  %1494 = vmatprep.subr.mxu0 0.0
  %1495 = vmatpush1.msra.mxu0 %v269
  %1496 = vmatprep.subr.mxu0 0.0
  %1497 = vmatpush1.msra.mxu0 %v268
  %1498 = vmatprep.subr.mxu0 0.0
  %1499 = vmatpush2.msra.mxu0 0.0
  %1500 = vmatprep.subr.mxu0 0.0
  %1501 = vmatpush2.msra.mxu0 0.0
  %1502 = vmatprep.subr.mxu0 0.0
  %1503 = vmatpush2.msra.mxu0 0.0
  %1504 = vmatprep.subr.mxu0 0.0
  %1505 = vmatpush2.msra.mxu0 0.0
  %1506 = vmatprep.subr.mxu0 0.0
  %1507 = vmatpush2.msra.mxu0 0.0
  %1508 = vmatprep.subr.mxu0 0.0
  %1509 = vmatpush2.msra.mxu0 0.0
  %1510 = vmatprep.subr.mxu0 0.0
  %1511 = vmatpush2.msra.mxu0 0.0
  %1512 = vmatprep.subr.mxu0 0.0
  %1513 = vmatpush2.msra.mxu0 0.0
  %1514 = vmatprep.subr.mxu0 0.0
  %1515 = vmatpush2.msra.mxu0 0.0
  %1516 = vmatprep.subr.mxu0 0.0
  %1517 = vmatpush2.msra.mxu0 0.0
  %1518 = vmatprep.subr.mxu0 0.0
  %1519 = vmatpush2.msra.mxu0 0.0
  %1520 = vmatprep.subr.mxu0 0.0
  %1521 = vmatpush2.msra.mxu0 0.0
  %1522 = vmatprep.subr.mxu0 0.0
  %1523 = vmatpush2.msra.mxu0 0.0
  %1524 = vmatprep.subr.mxu0 0.0
  %1525 = vmatpush2.msra.mxu0 0.0
  %1526 = vmatprep.subr.mxu0 0.0
  %1527 = vmatpush2.msra.mxu0 0.0
  %1528 = vmatprep.subr.mxu0 0.0
  %1529 = vmatpush2.msra.mxu0 0.0
  %1530 = vmatprep.mubr.f32.mxu0 0.0
  %1531 = vmatmul.mubr.f32.gmra.mxu0 %v1464
  %v1532 = vpop.f32.mrf.mxu0
  %v1533 = vadd.f32 %v1460, %v1532
  %v1534 = vpop.f32.mrf.mxu0
  %1535 = vdwg.mxu0
  %v1536 = vadd.f32 %v1533, %v424
  %v1537 = vtanh.pop %v1536
  %s1538 = scalar_lea.vmem [#allocation2], 48
  %v1539 = vld [vmem:[%s1538] sm:$0xff]
  %1540 = vmatprep.subr.mxu0 0.0
  %1541 = vmatpush1.msra.mxu0 0.0
  %1542 = vmatprep.subr.mxu0 0.0
  %1543 = vmatpush1.msra.mxu0 0.0
  %1544 = vmatprep.subr.mxu0 0.0
  %1545 = vmatpush1.msra.mxu0 0.0
  %1546 = vmatprep.subr.mxu0 0.0
  %1547 = vmatpush1.msra.mxu0 0.0
  %1548 = vmatprep.subr.mxu0 0.0
  %1549 = vmatpush1.msra.mxu0 0.0
  %1550 = vmatprep.subr.mxu0 0.0
  %1551 = vmatpush1.msra.mxu0 0.0
  %1552 = vmatprep.subr.mxu0 0.0
  %1553 = vmatpush1.msra.mxu0 0.0
  %1554 = vmatprep.subr.mxu0 0.0
  %1555 = vmatpush1.msra.mxu0 0.0
  %1556 = vmatprep.subr.mxu0 0.0
  %1557 = vmatpush1.msra.mxu0 0.0
  %1558 = vmatprep.subr.mxu0 0.0
  %1559 = vmatpush1.msra.mxu0 0.0
  %1560 = vmatprep.subr.mxu0 0.0
  %1561 = vmatpush1.msra.mxu0 0.0
  %1562 = vmatprep.subr.mxu0 0.0
  %1563 = vmatpush1.msra.mxu0 0.0
  %1564 = vmatprep.subr.mxu0 0.0
  %1565 = vmatpush1.msra.mxu0 %v192
  %1566 = vmatprep.subr.mxu0 0.0
  %1567 = vmatpush1.msra.mxu0 %v191
  %1568 = vmatprep.subr.mxu0 0.0
  %1569 = vmatpush1.msra.mxu0 %v190
  %1570 = vmatprep.subr.mxu0 0.0
  %1571 = vmatpush1.msra.mxu0 %v189
  %1572 = vmatprep.subr.mxu0 0.0
  %1573 = vmatpush2.msra.mxu0 0.0
  %1574 = vmatprep.subr.mxu0 0.0
  %1575 = vmatpush2.msra.mxu0 0.0
  %1576 = vmatprep.subr.mxu0 0.0
  %1577 = vmatpush2.msra.mxu0 0.0
  %1578 = vmatprep.subr.mxu0 0.0
  %1579 = vmatpush2.msra.mxu0 0.0
  %1580 = vmatprep.subr.mxu0 0.0
  %1581 = vmatpush2.msra.mxu0 0.0
  %1582 = vmatprep.subr.mxu0 0.0
  %1583 = vmatpush2.msra.mxu0 0.0
  %1584 = vmatprep.subr.mxu0 0.0
  %1585 = vmatpush2.msra.mxu0 0.0
  %1586 = vmatprep.subr.mxu0 0.0
  %1587 = vmatpush2.msra.mxu0 0.0
  %1588 = vmatprep.subr.mxu0 0.0
  %1589 = vmatpush2.msra.mxu0 0.0
  %1590 = vmatprep.subr.mxu0 0.0
  %1591 = vmatpush2.msra.mxu0 0.0
  %1592 = vmatprep.subr.mxu0 0.0
  %1593 = vmatpush2.msra.mxu0 0.0
  %1594 = vmatprep.subr.mxu0 0.0
  %1595 = vmatpush2.msra.mxu0 0.0
  %1596 = vmatprep.subr.mxu0 0.0
  %1597 = vmatpush2.msra.mxu0 0.0
  %1598 = vmatprep.subr.mxu0 0.0
  %1599 = vmatpush2.msra.mxu0 0.0
  %1600 = vmatprep.subr.mxu0 0.0
  %1601 = vmatpush2.msra.mxu0 0.0
  %1602 = vmatprep.subr.mxu0 0.0
  %1603 = vmatpush2.msra.mxu0 0.0
  %1604 = vmatprep.mubr.f32.mxu0 0.0
  %1605 = vmatmul.mubr.f32.gmra.mxu0 %v1464
  %v1606 = vpop.f32.mrf.mxu0
  %v1607 = vadd.f32 0.0, %v1606
  %v1608 = vpop.f32.mrf.mxu0
  %1609 = vdwg.mxu0
  %v1610 = vadd.f32 %v1539, %v1607
  %v1611 = vtanh.pop %v1610
  %v1613 = vsel %vm179, %v1537, 0
  %1615 = vmatprep.subr.mxu0 0.0
  %1616 = vmatpush1.msra.mxu0 0.0
  %1617 = vmatprep.subr.mxu0 0.0
  %1618 = vmatpush1.msra.mxu0 0.0
  %1619 = vmatprep.subr.mxu0 0.0
  %1620 = vmatpush1.msra.mxu0 0.0
  %1621 = vmatprep.subr.mxu0 0.0
  %1622 = vmatpush1.msra.mxu0 0.0
  %1623 = vmatprep.subr.mxu0 0.0
  %1624 = vmatpush1.msra.mxu0 0.0
  %1625 = vmatprep.subr.mxu0 0.0
  %1626 = vmatpush1.msra.mxu0 0.0
  %1627 = vmatprep.subr.mxu0 0.0
  %1628 = vmatpush1.msra.mxu0 0.0
  %1629 = vmatprep.subr.mxu0 0.0
  %1630 = vmatpush1.msra.mxu0 0.0
  %1631 = vmatprep.subr.mxu0 0.0
  %1632 = vmatpush1.msra.mxu0 0.0
  %1633 = vmatprep.subr.mxu0 0.0
  %1634 = vmatpush1.msra.mxu0 0.0
  %1635 = vmatprep.subr.mxu0 0.0
  %1636 = vmatpush1.msra.mxu0 0.0
  %1637 = vmatprep.subr.mxu0 0.0
  %1638 = vmatpush1.msra.mxu0 0.0
  %1639 = vmatprep.subr.mxu0 0.0
  %1640 = vmatpush1.msra.mxu0 %v275
  %1641 = vmatprep.subr.mxu0 0.0
  %1642 = vmatpush1.msra.mxu0 %v274
  %1643 = vmatprep.subr.mxu0 0.0
  %1644 = vmatpush1.msra.mxu0 %v273
  %1645 = vmatprep.subr.mxu0 0.0
  %1646 = vmatpush1.msra.mxu0 %v272
  %1647 = vmatprep.subr.mxu0 0.0
  %1648 = vmatpush2.msra.mxu0 0.0
  %1649 = vmatprep.subr.mxu0 0.0
  %1650 = vmatpush2.msra.mxu0 0.0
  %1651 = vmatprep.subr.mxu0 0.0
  %1652 = vmatpush2.msra.mxu0 0.0
  %1653 = vmatprep.subr.mxu0 0.0
  %1654 = vmatpush2.msra.mxu0 0.0
  %1655 = vmatprep.subr.mxu0 0.0
  %1656 = vmatpush2.msra.mxu0 0.0
  %1657 = vmatprep.subr.mxu0 0.0
  %1658 = vmatpush2.msra.mxu0 0.0
  %1659 = vmatprep.subr.mxu0 0.0
  %1660 = vmatpush2.msra.mxu0 0.0
  %1661 = vmatprep.subr.mxu0 0.0
  %1662 = vmatpush2.msra.mxu0 0.0
  %1663 = vmatprep.subr.mxu0 0.0
  %1664 = vmatpush2.msra.mxu0 0.0
  %1665 = vmatprep.subr.mxu0 0.0
  %1666 = vmatpush2.msra.mxu0 0.0
  %1667 = vmatprep.subr.mxu0 0.0
  %1668 = vmatpush2.msra.mxu0 0.0
  %1669 = vmatprep.subr.mxu0 0.0
  %1670 = vmatpush2.msra.mxu0 0.0
  %1671 = vmatprep.subr.mxu0 0.0
  %1672 = vmatpush2.msra.mxu0 0.0
  %1673 = vmatprep.subr.mxu0 0.0
  %1674 = vmatpush2.msra.mxu0 0.0
  %1675 = vmatprep.subr.mxu0 0.0
  %1676 = vmatpush2.msra.mxu0 0.0
  %1677 = vmatprep.subr.mxu0 0.0
  %1678 = vmatpush2.msra.mxu0 0.0
  %1679 = vmatprep.mubr.f32.mxu0 0.0
  %1680 = vmatmul.mubr.f32.gmra.mxu0 %v1613
  %v1681 = vpop.f32.mrf.mxu0
  %v1682 = vadd.f32 0.0, %v1681
  %v1683 = vpop.f32.mrf.mxu0
  %1684 = vdwg.mxu0
  %v1686 = vsel %vm179, %v1611, 0
  %1688 = vmatprep.subr.mxu0 0.0
  %1689 = vmatpush1.msra.mxu0 0.0
  %1690 = vmatprep.subr.mxu0 0.0
  %1691 = vmatpush1.msra.mxu0 0.0
  %1692 = vmatprep.subr.mxu0 0.0
  %1693 = vmatpush1.msra.mxu0 0.0
  %1694 = vmatprep.subr.mxu0 0.0
  %1695 = vmatpush1.msra.mxu0 0.0
  %1696 = vmatprep.subr.mxu0 0.0
  %1697 = vmatpush1.msra.mxu0 0.0
  %1698 = vmatprep.subr.mxu0 0.0
  %1699 = vmatpush1.msra.mxu0 0.0
  %1700 = vmatprep.subr.mxu0 0.0
  %1701 = vmatpush1.msra.mxu0 0.0
  %1702 = vmatprep.subr.mxu0 0.0
  %1703 = vmatpush1.msra.mxu0 0.0
  %1704 = vmatprep.subr.mxu0 0.0
  %1705 = vmatpush1.msra.mxu0 0.0
  %1706 = vmatprep.subr.mxu0 0.0
  %1707 = vmatpush1.msra.mxu0 0.0
  %1708 = vmatprep.subr.mxu0 0.0
  %1709 = vmatpush1.msra.mxu0 0.0
  %1710 = vmatprep.subr.mxu0 0.0
  %1711 = vmatpush1.msra.mxu0 0.0
  %1712 = vmatprep.subr.mxu0 0.0
  %1713 = vmatpush1.msra.mxu0 %v271
  %1714 = vmatprep.subr.mxu0 0.0
  %1715 = vmatpush1.msra.mxu0 %v270
  %1716 = vmatprep.subr.mxu0 0.0
  %1717 = vmatpush1.msra.mxu0 %v269
  %1718 = vmatprep.subr.mxu0 0.0
  %1719 = vmatpush1.msra.mxu0 %v268
  %1720 = vmatprep.subr.mxu0 0.0
  %1721 = vmatpush2.msra.mxu0 0.0
  %1722 = vmatprep.subr.mxu0 0.0
  %1723 = vmatpush2.msra.mxu0 0.0
  %1724 = vmatprep.subr.mxu0 0.0
  %1725 = vmatpush2.msra.mxu0 0.0
  %1726 = vmatprep.subr.mxu0 0.0
  %1727 = vmatpush2.msra.mxu0 0.0
  %1728 = vmatprep.subr.mxu0 0.0
  %1729 = vmatpush2.msra.mxu0 0.0
  %1730 = vmatprep.subr.mxu0 0.0
  %1731 = vmatpush2.msra.mxu0 0.0
  %1732 = vmatprep.subr.mxu0 0.0
  %1733 = vmatpush2.msra.mxu0 0.0
  %1734 = vmatprep.subr.mxu0 0.0
  %1735 = vmatpush2.msra.mxu0 0.0
  %1736 = vmatprep.subr.mxu0 0.0
  %1737 = vmatpush2.msra.mxu0 0.0
  %1738 = vmatprep.subr.mxu0 0.0
  %1739 = vmatpush2.msra.mxu0 0.0
  %1740 = vmatprep.subr.mxu0 0.0
  %1741 = vmatpush2.msra.mxu0 0.0
  %1742 = vmatprep.subr.mxu0 0.0
  %1743 = vmatpush2.msra.mxu0 0.0
  %1744 = vmatprep.subr.mxu0 0.0
  %1745 = vmatpush2.msra.mxu0 0.0
  %1746 = vmatprep.subr.mxu0 0.0
  %1747 = vmatpush2.msra.mxu0 0.0
  %1748 = vmatprep.subr.mxu0 0.0
  %1749 = vmatpush2.msra.mxu0 0.0
  %1750 = vmatprep.subr.mxu0 0.0
  %1751 = vmatpush2.msra.mxu0 0.0
  %1752 = vmatprep.mubr.f32.mxu0 0.0
  %1753 = vmatmul.mubr.f32.gmra.mxu0 %v1686
  %v1754 = vpop.f32.mrf.mxu0
  %v1755 = vadd.f32 %v1682, %v1754
  %v1756 = vpop.f32.mrf.mxu0
  %1757 = vdwg.mxu0
  %v1758 = vadd.f32 %v1755, %v424
  %v1759 = vtanh.pop %v1758
  %s1760 = scalar_lea.vmem [#allocation2], 56
  %v1761 = vld [vmem:[%s1760] sm:$0xff]
  %1762 = vmatprep.subr.mxu0 0.0
  %1763 = vmatpush1.msra.mxu0 0.0
  %1764 = vmatprep.subr.mxu0 0.0
  %1765 = vmatpush1.msra.mxu0 0.0
  %1766 = vmatprep.subr.mxu0 0.0
  %1767 = vmatpush1.msra.mxu0 0.0
  %1768 = vmatprep.subr.mxu0 0.0
  %1769 = vmatpush1.msra.mxu0 0.0
  %1770 = vmatprep.subr.mxu0 0.0
  %1771 = vmatpush1.msra.mxu0 0.0
  %1772 = vmatprep.subr.mxu0 0.0
  %1773 = vmatpush1.msra.mxu0 0.0
  %1774 = vmatprep.subr.mxu0 0.0
  %1775 = vmatpush1.msra.mxu0 0.0
  %1776 = vmatprep.subr.mxu0 0.0
  %1777 = vmatpush1.msra.mxu0 0.0
  %1778 = vmatprep.subr.mxu0 0.0
  %1779 = vmatpush1.msra.mxu0 0.0
  %1780 = vmatprep.subr.mxu0 0.0
  %1781 = vmatpush1.msra.mxu0 0.0
  %1782 = vmatprep.subr.mxu0 0.0
  %1783 = vmatpush1.msra.mxu0 0.0
  %1784 = vmatprep.subr.mxu0 0.0
  %1785 = vmatpush1.msra.mxu0 0.0
  %1786 = vmatprep.subr.mxu0 0.0
  %1787 = vmatpush1.msra.mxu0 %v192
  %1788 = vmatprep.subr.mxu0 0.0
  %1789 = vmatpush1.msra.mxu0 %v191
  %1790 = vmatprep.subr.mxu0 0.0
  %1791 = vmatpush1.msra.mxu0 %v190
  %1792 = vmatprep.subr.mxu0 0.0
  %1793 = vmatpush1.msra.mxu0 %v189
  %1794 = vmatprep.subr.mxu0 0.0
  %1795 = vmatpush2.msra.mxu0 0.0
  %1796 = vmatprep.subr.mxu0 0.0
  %1797 = vmatpush2.msra.mxu0 0.0
  %1798 = vmatprep.subr.mxu0 0.0
  %1799 = vmatpush2.msra.mxu0 0.0
  %1800 = vmatprep.subr.mxu0 0.0
  %1801 = vmatpush2.msra.mxu0 0.0
  %1802 = vmatprep.subr.mxu0 0.0
  %1803 = vmatpush2.msra.mxu0 0.0
  %1804 = vmatprep.subr.mxu0 0.0
  %1805 = vmatpush2.msra.mxu0 0.0
  %1806 = vmatprep.subr.mxu0 0.0
  %1807 = vmatpush2.msra.mxu0 0.0
  %1808 = vmatprep.subr.mxu0 0.0
  %1809 = vmatpush2.msra.mxu0 0.0
  %1810 = vmatprep.subr.mxu0 0.0
  %1811 = vmatpush2.msra.mxu0 0.0
  %1812 = vmatprep.subr.mxu0 0.0
  %1813 = vmatpush2.msra.mxu0 0.0
  %1814 = vmatprep.subr.mxu0 0.0
  %1815 = vmatpush2.msra.mxu0 0.0
  %1816 = vmatprep.subr.mxu0 0.0
  %1817 = vmatpush2.msra.mxu0 0.0
  %1818 = vmatprep.subr.mxu0 0.0
  %1819 = vmatpush2.msra.mxu0 0.0
  %1820 = vmatprep.subr.mxu0 0.0
  %1821 = vmatpush2.msra.mxu0 0.0
  %1822 = vmatprep.subr.mxu0 0.0
  %1823 = vmatpush2.msra.mxu0 0.0
  %1824 = vmatprep.subr.mxu0 0.0
  %1825 = vmatpush2.msra.mxu0 0.0
  %1826 = vmatprep.mubr.f32.mxu0 0.0
  %1827 = vmatmul.mubr.f32.gmra.mxu0 %v1686
  %v1828 = vpop.f32.mrf.mxu0
  %v1829 = vadd.f32 0.0, %v1828
  %v1830 = vpop.f32.mrf.mxu0
  %1831 = vdwg.mxu0
  %v1832 = vadd.f32 %v1761, %v1829
  %v1833 = vtanh.pop %v1832
  %v1835 = vsel %vm179, %v1759, 0
  %1837 = vmatprep.subr.mxu0 0.0
  %1838 = vmatpush1.msra.mxu0 0.0
  %1839 = vmatprep.subr.mxu0 0.0
  %1840 = vmatpush1.msra.mxu0 0.0
  %1841 = vmatprep.subr.mxu0 0.0
  %1842 = vmatpush1.msra.mxu0 0.0
  %1843 = vmatprep.subr.mxu0 0.0
  %1844 = vmatpush1.msra.mxu0 0.0
  %1845 = vmatprep.subr.mxu0 0.0
  %1846 = vmatpush1.msra.mxu0 0.0
  %1847 = vmatprep.subr.mxu0 0.0
  %1848 = vmatpush1.msra.mxu0 0.0
  %1849 = vmatprep.subr.mxu0 0.0
  %1850 = vmatpush1.msra.mxu0 0.0
  %1851 = vmatprep.subr.mxu0 0.0
  %1852 = vmatpush1.msra.mxu0 0.0
  %1853 = vmatprep.subr.mxu0 0.0
  %1854 = vmatpush1.msra.mxu0 0.0
  %1855 = vmatprep.subr.mxu0 0.0
  %1856 = vmatpush1.msra.mxu0 0.0
  %1857 = vmatprep.subr.mxu0 0.0
  %1858 = vmatpush1.msra.mxu0 0.0
  %1859 = vmatprep.subr.mxu0 0.0
  %1860 = vmatpush1.msra.mxu0 0.0
  %1861 = vmatprep.subr.mxu0 0.0
  %1862 = vmatpush1.msra.mxu0 %v275
  %1863 = vmatprep.subr.mxu0 0.0
  %1864 = vmatpush1.msra.mxu0 %v274
  %1865 = vmatprep.subr.mxu0 0.0
  %1866 = vmatpush1.msra.mxu0 %v273
  %1867 = vmatprep.subr.mxu0 0.0
  %1868 = vmatpush1.msra.mxu0 %v272
  %1869 = vmatprep.subr.mxu0 0.0
  %1870 = vmatpush2.msra.mxu0 0.0
  %1871 = vmatprep.subr.mxu0 0.0
  %1872 = vmatpush2.msra.mxu0 0.0
  %1873 = vmatprep.subr.mxu0 0.0
  %1874 = vmatpush2.msra.mxu0 0.0
  %1875 = vmatprep.subr.mxu0 0.0
  %1876 = vmatpush2.msra.mxu0 0.0
  %1877 = vmatprep.subr.mxu0 0.0
  %1878 = vmatpush2.msra.mxu0 0.0
  %1879 = vmatprep.subr.mxu0 0.0
  %1880 = vmatpush2.msra.mxu0 0.0
  %1881 = vmatprep.subr.mxu0 0.0
  %1882 = vmatpush2.msra.mxu0 0.0
  %1883 = vmatprep.subr.mxu0 0.0
  %1884 = vmatpush2.msra.mxu0 0.0
  %1885 = vmatprep.subr.mxu0 0.0
  %1886 = vmatpush2.msra.mxu0 0.0
  %1887 = vmatprep.subr.mxu0 0.0
  %1888 = vmatpush2.msra.mxu0 0.0
  %1889 = vmatprep.subr.mxu0 0.0
  %1890 = vmatpush2.msra.mxu0 0.0
  %1891 = vmatprep.subr.mxu0 0.0
  %1892 = vmatpush2.msra.mxu0 0.0
  %1893 = vmatprep.subr.mxu0 0.0
  %1894 = vmatpush2.msra.mxu0 0.0
  %1895 = vmatprep.subr.mxu0 0.0
  %1896 = vmatpush2.msra.mxu0 0.0
  %1897 = vmatprep.subr.mxu0 0.0
  %1898 = vmatpush2.msra.mxu0 0.0
  %1899 = vmatprep.subr.mxu0 0.0
  %1900 = vmatpush2.msra.mxu0 0.0
  %1901 = vmatprep.mubr.f32.mxu0 0.0
  %1902 = vmatmul.mubr.f32.gmra.mxu0 %v1835
  %v1903 = vpop.f32.mrf.mxu0
  %v1904 = vadd.f32 0.0, %v1903
  %v1905 = vpop.f32.mrf.mxu0
  %1906 = vdwg.mxu0
  %v1908 = vsel %vm179, %v1833, 0
  %1910 = vmatprep.subr.mxu0 0.0
  %1911 = vmatpush1.msra.mxu0 0.0
  %1912 = vmatprep.subr.mxu0 0.0
  %1913 = vmatpush1.msra.mxu0 0.0
  %1914 = vmatprep.subr.mxu0 0.0
  %1915 = vmatpush1.msra.mxu0 0.0
  %1916 = vmatprep.subr.mxu0 0.0
  %1917 = vmatpush1.msra.mxu0 0.0
  %1918 = vmatprep.subr.mxu0 0.0
  %1919 = vmatpush1.msra.mxu0 0.0
  %1920 = vmatprep.subr.mxu0 0.0
  %1921 = vmatpush1.msra.mxu0 0.0
  %1922 = vmatprep.subr.mxu0 0.0
  %1923 = vmatpush1.msra.mxu0 0.0
  %1924 = vmatprep.subr.mxu0 0.0
  %1925 = vmatpush1.msra.mxu0 0.0
  %1926 = vmatprep.subr.mxu0 0.0
  %1927 = vmatpush1.msra.mxu0 0.0
  %1928 = vmatprep.subr.mxu0 0.0
  %1929 = vmatpush1.msra.mxu0 0.0
  %1930 = vmatprep.subr.mxu0 0.0
  %1931 = vmatpush1.msra.mxu0 0.0
  %1932 = vmatprep.subr.mxu0 0.0
  %1933 = vmatpush1.msra.mxu0 0.0
  %1934 = vmatprep.subr.mxu0 0.0
  %1935 = vmatpush1.msra.mxu0 %v271
  %1936 = vmatprep.subr.mxu0 0.0
  %1937 = vmatpush1.msra.mxu0 %v270
  %1938 = vmatprep.subr.mxu0 0.0
  %1939 = vmatpush1.msra.mxu0 %v269
  %1940 = vmatprep.subr.mxu0 0.0
  %1941 = vmatpush1.msra.mxu0 %v268
  %1942 = vmatprep.subr.mxu0 0.0
  %1943 = vmatpush2.msra.mxu0 0.0
  %1944 = vmatprep.subr.mxu0 0.0
  %1945 = vmatpush2.msra.mxu0 0.0
  %1946 = vmatprep.subr.mxu0 0.0
  %1947 = vmatpush2.msra.mxu0 0.0
  %1948 = vmatprep.subr.mxu0 0.0
  %1949 = vmatpush2.msra.mxu0 0.0
  %1950 = vmatprep.subr.mxu0 0.0
  %1951 = vmatpush2.msra.mxu0 0.0
  %1952 = vmatprep.subr.mxu0 0.0
  %1953 = vmatpush2.msra.mxu0 0.0
  %1954 = vmatprep.subr.mxu0 0.0
  %1955 = vmatpush2.msra.mxu0 0.0
  %1956 = vmatprep.subr.mxu0 0.0
  %1957 = vmatpush2.msra.mxu0 0.0
  %1958 = vmatprep.subr.mxu0 0.0
  %1959 = vmatpush2.msra.mxu0 0.0
  %1960 = vmatprep.subr.mxu0 0.0
  %1961 = vmatpush2.msra.mxu0 0.0
  %1962 = vmatprep.subr.mxu0 0.0
  %1963 = vmatpush2.msra.mxu0 0.0
  %1964 = vmatprep.subr.mxu0 0.0
  %1965 = vmatpush2.msra.mxu0 0.0
  %1966 = vmatprep.subr.mxu0 0.0
  %1967 = vmatpush2.msra.mxu0 0.0
  %1968 = vmatprep.subr.mxu0 0.0
  %1969 = vmatpush2.msra.mxu0 0.0
  %1970 = vmatprep.subr.mxu0 0.0
  %1971 = vmatpush2.msra.mxu0 0.0
  %1972 = vmatprep.subr.mxu0 0.0
  %1973 = vmatpush2.msra.mxu0 0.0
  %1974 = vmatprep.mubr.f32.mxu0 0.0
  %1975 = vmatmul.mubr.f32.gmra.mxu0 %v1908
  %v1976 = vpop.f32.mrf.mxu0
  %v1977 = vadd.f32 %v1904, %v1976
  %v1978 = vpop.f32.mrf.mxu0
  %1979 = vdwg.mxu0
  %v1980 = vadd.f32 %v1977, %v424
  %v1981 = vtanh.pop %v1980
  %v1982 = vld [vmem:[%s7] sm:$0xff]
  %v1983 = vld [vmem:[%s7 + $0x8] sm:$0xff]
  %v1984 = vld [vmem:[%s7 + $0x10] sm:$0xff]
  %v1985 = vld [vmem:[%s7 + $0x18] sm:$0xff]
  %v1986 = vld [vmem:[%s8] sm:$0x1]
  %v1988 = vlaneseq
  %v1989 = vshrl.u32 %v1988, 7
  %v1990 = vsub.s32 0, %v1989
  %v1991 = vrot.slane %v1986, %v1990
  %v1994 = vsel %vm179, %v1981, 0
  %1996 = vmatprep.subr.mxu0 0.0
  %1997 = vmatpush1.msra.mxu0 0.0
  %1998 = vmatprep.subr.mxu0 0.0
  %1999 = vmatpush1.msra.mxu0 0.0
  %2000 = vmatprep.subr.mxu0 0.0
  %2001 = vmatpush1.msra.mxu0 0.0
  %2002 = vmatprep.subr.mxu0 0.0
  %2003 = vmatpush1.msra.mxu0 0.0
  %2004 = vmatprep.subr.mxu0 0.0
  %2005 = vmatpush1.msra.mxu0 0.0
  %2006 = vmatprep.subr.mxu0 0.0
  %2007 = vmatpush1.msra.mxu0 0.0
  %2008 = vmatprep.subr.mxu0 0.0
  %2009 = vmatpush1.msra.mxu0 0.0
  %2010 = vmatprep.subr.mxu0 0.0
  %2011 = vmatpush1.msra.mxu0 0.0
  %2012 = vmatprep.subr.mxu0 0.0
  %2013 = vmatpush1.msra.mxu0 0.0
  %2014 = vmatprep.subr.mxu0 0.0
  %2015 = vmatpush1.msra.mxu0 0.0
  %2016 = vmatprep.subr.mxu0 0.0
  %2017 = vmatpush1.msra.mxu0 0.0
  %2018 = vmatprep.subr.mxu0 0.0
  %2019 = vmatpush1.msra.mxu0 0.0
  %2020 = vmatprep.subr.mxu0 0.0
  %2021 = vmatpush1.msra.mxu0 %v1985
  %2022 = vmatprep.subr.mxu0 0.0
  %2023 = vmatpush1.msra.mxu0 %v1984
  %2024 = vmatprep.subr.mxu0 0.0
  %2025 = vmatpush1.msra.mxu0 %v1983
  %2026 = vmatprep.subr.mxu0 0.0
  %2027 = vmatpush1.msra.mxu0 %v1982
  %2028 = vmatprep.subr.mxu0 0.0
  %2029 = vmatpush2.msra.mxu0 0.0
  %2030 = vmatprep.subr.mxu0 0.0
  %2031 = vmatpush2.msra.mxu0 0.0
  %2032 = vmatprep.subr.mxu0 0.0
  %2033 = vmatpush2.msra.mxu0 0.0
  %2034 = vmatprep.subr.mxu0 0.0
  %2035 = vmatpush2.msra.mxu0 0.0
  %2036 = vmatprep.subr.mxu0 0.0
  %2037 = vmatpush2.msra.mxu0 0.0
  %2038 = vmatprep.subr.mxu0 0.0
  %2039 = vmatpush2.msra.mxu0 0.0
  %2040 = vmatprep.subr.mxu0 0.0
  %2041 = vmatpush2.msra.mxu0 0.0
  %2042 = vmatprep.subr.mxu0 0.0
  %2043 = vmatpush2.msra.mxu0 0.0
  %2044 = vmatprep.subr.mxu0 0.0
  %2045 = vmatpush2.msra.mxu0 0.0
  %2046 = vmatprep.subr.mxu0 0.0
  %2047 = vmatpush2.msra.mxu0 0.0
  %2048 = vmatprep.subr.mxu0 0.0
  %2049 = vmatpush2.msra.mxu0 0.0
  %2050 = vmatprep.subr.mxu0 0.0
  %2051 = vmatpush2.msra.mxu0 0.0
  %2052 = vmatprep.subr.mxu0 0.0
  %2053 = vmatpush2.msra.mxu0 0.0
  %2054 = vmatprep.subr.mxu0 0.0
  %2055 = vmatpush2.msra.mxu0 0.0
  %2056 = vmatprep.subr.mxu0 0.0
  %2057 = vmatpush2.msra.mxu0 0.0
  %2058 = vmatprep.subr.mxu0 0.0
  %2059 = vmatpush2.msra.mxu0 0.0
  %2060 = vmatprep.mubr.f32.mxu0 0.0
  %2061 = vmatmul.mubr.f32.gmra.mxu0 %v1994
  %v2062 = vpop.f32.mrf.mxu0
  %v2063 = vadd.f32 %v1991, %v2062
  %v2064 = vpop.f32.mrf.mxu0
  %2065 = vdwg.mxu0
  %2066 = vst [vmem:[%s9] sm:$0xff] %v2063
  // Predicated region
  $region38: #{rnn_forward.1} parent=0 // pred_check
    _
  $region39: #{rnn_forward.1} parent=0 // pred_check_branch
    %2068 = sbr.rel (0) target = $region41
  $region40: #{rnn_forward.1} parent=0 // pred_region
    _
  $region41: #{rnn_forward.1} parent=0 // pred_fallthru
    _
  // Predicated region
  $region42: #{rnn_forward.1} parent=0 // pred_check
    _
  $region43: #{rnn_forward.1} parent=0 // pred_check_branch
    %2070 = sbr.rel (0) target = $region45
  $region44: #{rnn_forward.1} parent=0 // pred_region
    _
  $region45: #{rnn_forward.1} parent=0 // pred_fallthru
    _

</llo_original>
